<compile_context>
chip_gen: v7x
topology: tpu7x:2x2x1
jax: 0.10.0
libtpu: 0.0.40
codegen_flags: <defaults>
</compile_context>

<pallas_src>
import jax
import jax.numpy as jnp
from jax.experimental import pallas as pl
from jax.experimental.pallas import tpu as pltpu


# ----------------------------- model dims (small) -----------------------------
VOCAB = 32
EMBED = 16
HIDDEN = 32
NUM_LAYERS = 2
BATCH = 4
SEQ = 8
IN0 = EMBED + HIDDEN          # GRU layer-0 input size (embed + context)
G3 = 3 * HIDDEN               # per-layer gate width (r, z, n) = 96

BP = 8                        # batch padded to the f32 sublane count
FUSE_W = 3 * 128              # fused recurrent weight width (128-aligned blocks)


# ------------------------------- Pallas kernel --------------------------------
def _decoder_kernel(gi0_ref, h0_ref, wg_ref, b_ref, wd_ref, out_ref, state_ref):
    """
    gi0_ref   : (SEQ*BP, G3)   pre-gathered  emb@wih0_e + bih0  (time-major, padded batch)
    h0_ref    : (L, BP, H)     initial hidden state (padded batch)
    wg_ref    : (3H, 384)      rows 0:64 = block-diag fused [whh0 | wih1 | whh1] (128-col blocks)
                               rows 64:96, cols 0:96 = wih0 context part
    b_ref     : (3*BP, G3)     pre-broadcast biases: [bhh0; bih1; bhh1]
    wd_ref    : (SEQ*H+1, SEQ*V)  rows 0:256 = block-diag dense weight, row 256 = tiled bd
    out_ref   : (BP, SEQ*V)    logits, batch-major lane-dense layout out[b, t*V+v]
    state_ref : (L, BP, H)     final hidden state
    """
    H = HIDDEN

    # ---- hoisted, time-invariant work (off the recurrent chain) -------------
    wih0_c = wg_ref[2 * H:3 * H, 0:G3]                               # (32, 96)
    gi_ctx = jnp.dot(h0_ref[NUM_LAYERS - 1], wih0_c,
                     preferred_element_type=jnp.float32)             # (8, 96)
    # Fold the (time-invariant) context projection into the input activations once.
    gi0_all = gi0_ref[...] + jnp.tile(gi_ctx, (SEQ, 1))              # (64, 96)

    w_fused = wg_ref[0:2 * H, :]                                     # (64, 384)
    bhh0_b = b_ref[0:BP, :]                                          # (8, 96) pre-broadcast
    bih1_b = b_ref[BP:2 * BP, :]
    bhh1_b = b_ref[2 * BP:3 * BP, :]

    def gru_cell(gi, gh, h_prev):
        # PyTorch GRU gate order r, z, n;  n uses r * (h @ Whh_n + bhh_n).
        rz = jax.nn.sigmoid(gi[:, 0:2 * H] + gh[:, 0:2 * H])         # fused r,z sigmoid
        r = rz[:, 0:H]
        z = rz[:, H:2 * H]
        n = jnp.tanh(gi[:, 2 * H:3 * H] + r * gh[:, 2 * H:3 * H])
        return (1.0 - z) * n + z * h_prev

    # ---- wavefront-interleaved 2-layer GRU recurrence ------------------------
    h0 = h0_ref[0]                                                   # (8, 32)
    h1 = h0_ref[1]
    ys = []
    for i in range(SEQ + 1):
        # One fused MXU push per wavefront step (block-diag packed weight):
        #   cols [  0: 96] -> h0_prev @ whh0   (layer-0 recurrent gates, step i)
        #   cols [128:224] -> h0_prev @ wih1   (layer-1 input gates; y0[i-1] == h0_prev)
        #   cols [256:352] -> h1_prev @ whh1   (layer-1 recurrent gates, step i-1)
        fused = jnp.dot(jnp.concatenate([h0, h1], axis=1), w_fused,
                        preferred_element_type=jnp.float32)          # (8, 384)
        if i < SEQ:                      # layer-0 step i
            h0 = gru_cell(gi0_all[i * BP:(i + 1) * BP, :],
                          fused[:, 0:G3] + bhh0_b, h0)
        if i >= 1:                       # layer-1 step i-1 (overlaps with layer-0 step i)
            h1 = gru_cell(fused[:, 128:128 + G3] + bih1_b,
                          fused[:, 256:256 + G3] + bhh1_b, h1)
            ys.append(h1)

    state_ref[0] = h0
    state_ref[1] = h1
    # TODO(synk): inter-layer dropout omitted (dropout=0 / eval mode in the reference module).

    # ---- vocab projection: one block-diag matmul into a lane-dense (8, 256) output ----
    y1_all = jnp.concatenate(ys, axis=1)                             # (8, SEQ*H) = (8, 256)
    out_ref[...] = (jnp.dot(y1_all, wd_ref[0:SEQ * H, :],
                            preferred_element_type=jnp.float32)
                    + wd_ref[SEQ * H:SEQ * H + 1, :])


def _run_decoder(gi0, h0, wgate, bias, wdense):
    vmem = pltpu.MemorySpace.VMEM
    return pl.pallas_call(
        _decoder_kernel,
        out_shape=(
            jax.ShapeDtypeStruct((BP, SEQ * VOCAB), jnp.float32),
            jax.ShapeDtypeStruct((NUM_LAYERS, BP, HIDDEN), jnp.float32),
        ),
        in_specs=[pl.BlockSpec(memory_space=vmem)] * 5,
        out_specs=(
            pl.BlockSpec(memory_space=vmem),
            pl.BlockSpec(memory_space=vmem),
        ),
    )(gi0, h0, wgate, bias, wdense)


# ------------------------------ parameter handling ------------------------------
def init_params(key):
    """Deterministic parameter init (uniform, a la PyTorch default scale)."""
    ks = jax.random.split(key, 12)
    s = 1.0 / jnp.sqrt(HIDDEN)
    u = lambda k, shape: jax.random.uniform(k, shape, jnp.float32, -s, s)
    params = {
        "embedding": jax.random.normal(ks[0], (VOCAB, EMBED), jnp.float32) * 0.1,
        # GRU weights stored pre-transposed: (in, 3H) so the kernel does x @ W.
        "wih0": u(ks[1], (IN0, G3)),
        "whh0": u(ks[2], (HIDDEN, G3)),
        "bih0": u(ks[3], (1, G3)),
        "bhh0": u(ks[4], (1, G3)),
        "wih1": u(ks[5], (HIDDEN, G3)),
        "whh1": u(ks[6], (HIDDEN, G3)),
        "bih1": u(ks[7], (1, G3)),
        "bhh1": u(ks[8], (1, G3)),
        "wd": u(ks[9], (HIDDEN, VOCAB)),
        "bd": u(ks[10], (1, VOCAB)),
    }
    return params


def pack_params(params):
    """One-time packing of kernel-ready buffers (removed from the per-call path)."""
    wih0_e = params["wih0"][:EMBED, :]                                # (16, 96)
    wih0_c = params["wih0"][EMBED:, :]                                # (32, 96)
    # Pre-projected embedding table: absorbs the layer-0 input matmul and bih0.
    tproj = jnp.dot(params["embedding"], wih0_e,
                    precision=jax.lax.Precision.HIGHEST) + params["bih0"]   # (V, 96)

    # Block-diag fused recurrent weight, 128-aligned column blocks.
    wfused = jnp.zeros((2 * HIDDEN, FUSE_W), jnp.float32)
    wfused = wfused.at[:HIDDEN, 0:G3].set(params["whh0"])
    wfused = wfused.at[:HIDDEN, 128:128 + G3].set(params["wih1"])
    wfused = wfused.at[HIDDEN:, 256:256 + G3].set(params["whh1"])
    wih0_c_pad = jnp.pad(wih0_c, ((0, 0), (0, FUSE_W - G3)))
    wgate = jnp.concatenate([wfused, wih0_c_pad], axis=0)             # (96, 384)

    # Biases pre-broadcast to (BP, G3) so the kernel never rebuilds broadcasts.
    bias = jnp.concatenate([
        jnp.broadcast_to(params["bhh0"], (BP, G3)),
        jnp.broadcast_to(params["bih1"], (BP, G3)),
        jnp.broadcast_to(params["bhh1"], (BP, G3)),
    ], axis=0)                                                        # (24, 96)

    # Block-diag dense weight: (BP, SEQ*H) @ (SEQ*H, SEQ*V) -> lane-dense (BP, SEQ*V).
    wd_blk = jnp.zeros((SEQ * HIDDEN, SEQ * VOCAB), jnp.float32)
    for t in range(SEQ):
        wd_blk = wd_blk.at[t * HIDDEN:(t + 1) * HIDDEN,
                           t * VOCAB:(t + 1) * VOCAB].set(params["wd"])
    bd_t = jnp.tile(params["bd"], (1, SEQ))                           # (1, 256)
    wdense = jnp.concatenate([wd_blk, bd_t], axis=0)                  # (257, 256)

    return {"tproj": tproj, "wgate": wgate, "bias": bias, "wdense": wdense}


@jax.jit
def decoder_forward(packed, X_ids, state):
    """X_ids: (B, S) int32 token ids; state: (L, B, H).  Mirrors Decoder.forward."""
    # Embedding lookup fused with the layer-0 input projection: gather rows of the
    # pre-projected table (time-major, batch padded to BP with zero rows).
    gi0 = jnp.take(packed["tproj"], jnp.transpose(X_ids), axis=0)     # (S, B, 3H)
    gi0 = jnp.pad(gi0, ((0, 0), (0, BP - BATCH), (0, 0))).reshape(SEQ * BP, G3)
    h0 = jnp.pad(state, ((0, 0), (0, BP - BATCH), (0, 0)))            # (L, BP, H)

    out, state_p = _run_decoder(gi0, h0, packed["wgate"], packed["bias"], packed["wdense"])

    logits = out[:BATCH].reshape(BATCH, SEQ, VOCAB)                   # (B, S, V)
    return logits, state_p[:, :BATCH, :]                              # (L, B, H)


# ------------------------------ pure-JAX reference ------------------------------
def _reference_forward(params, X_ids, state):
    emb = jnp.take(params["embedding"], X_ids, axis=0).transpose(1, 0, 2)
    context = jnp.broadcast_to(state[-1][None], (SEQ, BATCH, HIDDEN))
    x = jnp.concatenate([emb, context], axis=2)
    H = HIDDEN

    def gru_layer(x_seq, h, wih, whh, bih, bhh):
        def step(h, xt):
            gi = xt @ wih + bih
            gh = h @ whh + bhh
            r = jax.nn.sigmoid(gi[:, :H] + gh[:, :H])
            z = jax.nn.sigmoid(gi[:, H:2 * H] + gh[:, H:2 * H])
            n = jnp.tanh(gi[:, 2 * H:] + r * gh[:, 2 * H:])
            h_new = (1 - z) * n + z * h
            return h_new, h_new
        h_final, ys = jax.lax.scan(step, h, x_seq)
        return ys, h_final

    y0, h0f = gru_layer(x, state[0], params["wih0"], params["whh0"],
                        params["bih0"][0], params["bhh0"][0])
    y1, h1f = gru_layer(y0, state[1], params["wih1"], params["whh1"],
                        params["bih1"][0], params["bhh1"][0])
    logits = y1 @ params["wd"] + params["bd"][0]
    return jnp.transpose(logits, (1, 0, 2)), jnp.stack([h0f, h1f])


# ------------------------------------ main --------------------------------------
if __name__ == "__main__":
    key = jax.random.PRNGKey(0)
    k_param, k_ids, k_state = jax.random.split(key, 3)

    params = init_params(k_param)
    packed = pack_params(params)        # one-time packing (not in the per-call path)

    X_ids = jax.random.randint(k_ids, (BATCH, SEQ), 0, VOCAB, dtype=jnp.int32)
    state = jax.random.normal(k_state, (NUM_LAYERS, BATCH, HIDDEN), jnp.float32)

    out, new_state = decoder_forward(packed, X_ids, state)
    out = jax.block_until_ready(out)
    new_state = jax.block_until_ready(new_state)

    ref_out, ref_state = _reference_forward(params, X_ids, state)
    assert out.shape == (BATCH, SEQ, VOCAB)
    assert new_state.shape == (NUM_LAYERS, BATCH, HIDDEN)
    assert jnp.allclose(out, ref_out, atol=2e-5, rtol=2e-5)
    assert jnp.allclose(new_state, ref_state, atol=2e-5, rtol=2e-5)

    print("KERNEL_OK")
</pallas_src>

<mosaic_0001>
module attributes {stable_mosaic.version = 11 : i64} {
  func.func @_decoder_kernel(%arg0: memref<64x96xf32, #tpu.memory_space<vmem>>, %arg1: memref<2x8x32xf32, #tpu.memory_space<vmem>>, %arg2: memref<96x384xf32, #tpu.memory_space<vmem>>, %arg3: memref<24x96xf32, #tpu.memory_space<vmem>>, %arg4: memref<257x256xf32, #tpu.memory_space<vmem>>, %arg5: memref<8x256xf32, #tpu.memory_space<vmem>>, %arg6: memref<2x8x32xf32, #tpu.memory_space<vmem>>) attributes {dimension_semantics = [], scalar_prefetch = 0 : i64, scratch_operands = 0 : i64, tpu.core_type = #tpu.core_type<tc>} {
    %c64 = arith.constant 64 : index
    %c0 = arith.constant 0 : index
    %0 = vector.load %arg2[%c64, %c0] : memref<96x384xf32, #tpu.memory_space<vmem>>, vector<32x96xf32>
    %c1 = arith.constant 1 : index
    %c0_0 = arith.constant 0 : index
    %c0_1 = arith.constant 0 : index
    %1 = vector.load %arg1[%c1, %c0_0, %c0_1] : memref<2x8x32xf32, #tpu.memory_space<vmem>>, vector<1x8x32xf32>
    %2 = vector.shape_cast %1 : vector<1x8x32xf32> to vector<8x32xf32>
    %cst = arith.constant dense<0.000000e+00> : vector<8x96xf32>
    %3 = tpu.matmul %2, %0, %cst {dimension_numbers = #tpu.dot_dimension_numbers<[1], [0], [0], [1], [0, 0, 1, 1], [], []>} : vector<8x32xf32>, vector<32x96xf32>, vector<8x96xf32> -> vector<8x96xf32>
    %c0_2 = arith.constant 0 : index
    %c0_3 = arith.constant 0 : index
    %4 = vector.load %arg0[%c0_2, %c0_3] : memref<64x96xf32, #tpu.memory_space<vmem>>, vector<64x96xf32>
    %5 = tpu.concatenate %3, %3, %3, %3, %3, %3, %3, %3 in 0 : vector<8x96xf32>, vector<8x96xf32>, vector<8x96xf32>, vector<8x96xf32>, vector<8x96xf32>, vector<8x96xf32>, vector<8x96xf32>, vector<8x96xf32> -> vector<64x96xf32>
    %6 = arith.addf %4, %5 : vector<64x96xf32>
    %c0_4 = arith.constant 0 : index
    %c0_5 = arith.constant 0 : index
    %7 = vector.load %arg2[%c0_4, %c0_5] : memref<96x384xf32, #tpu.memory_space<vmem>>, vector<64x384xf32>
    %c0_6 = arith.constant 0 : index
    %c0_7 = arith.constant 0 : index
    %8 = vector.load %arg3[%c0_6, %c0_7] : memref<24x96xf32, #tpu.memory_space<vmem>>, vector<8x96xf32>
    %c8 = arith.constant 8 : index
    %c0_8 = arith.constant 0 : index
    %9 = vector.load %arg3[%c8, %c0_8] : memref<24x96xf32, #tpu.memory_space<vmem>>, vector<8x96xf32>
    %c16 = arith.constant 16 : index
    %c0_9 = arith.constant 0 : index
    %10 = vector.load %arg3[%c16, %c0_9] : memref<24x96xf32, #tpu.memory_space<vmem>>, vector<8x96xf32>
    %c0_10 = arith.constant 0 : index
    %c0_11 = arith.constant 0 : index
    %c0_12 = arith.constant 0 : index
    %11 = vector.load %arg1[%c0_10, %c0_11, %c0_12] : memref<2x8x32xf32, #tpu.memory_space<vmem>>, vector<1x8x32xf32>
    %12 = vector.shape_cast %11 : vector<1x8x32xf32> to vector<8x32xf32>
    %c1_13 = arith.constant 1 : index
    %c0_14 = arith.constant 0 : index
    %c0_15 = arith.constant 0 : index
    %13 = vector.load %arg1[%c1_13, %c0_14, %c0_15] : memref<2x8x32xf32, #tpu.memory_space<vmem>>, vector<1x8x32xf32>
    %14 = vector.shape_cast %13 : vector<1x8x32xf32> to vector<8x32xf32>
    %15 = tpu.concatenate %12, %14 in 1 : vector<8x32xf32>, vector<8x32xf32> -> vector<8x64xf32>
    %cst_16 = arith.constant dense<0.000000e+00> : vector<8x384xf32>
    %16 = tpu.matmul %15, %7, %cst_16 {dimension_numbers = #tpu.dot_dimension_numbers<[1], [0], [0], [1], [0, 0, 1, 1], [], []>} : vector<8x64xf32>, vector<64x384xf32>, vector<8x384xf32> -> vector<8x384xf32>
    %17 = vector.extract_strided_slice %6 {offsets = [0, 0], sizes = [8, 96], strides = [1, 1]} : vector<64x96xf32> to vector<8x96xf32>
    %18 = vector.extract_strided_slice %16 {offsets = [0, 0], sizes = [8, 96], strides = [1, 1]} : vector<8x384xf32> to vector<8x96xf32>
    %19 = arith.addf %18, %8 : vector<8x96xf32>
    %20 = vector.extract_strided_slice %17 {offsets = [0, 0], sizes = [8, 64], strides = [1, 1]} : vector<8x96xf32> to vector<8x64xf32>
    %21 = vector.extract_strided_slice %19 {offsets = [0, 0], sizes = [8, 64], strides = [1, 1]} : vector<8x96xf32> to vector<8x64xf32>
    %22 = arith.addf %20, %21 : vector<8x64xf32>
    %23 = arith.negf %22 : vector<8x64xf32>
    %24 = math.exp %23 : vector<8x64xf32>
    %cst_17 = arith.constant 1.000000e+00 : f32
    %25 = vector.broadcast %cst_17 : f32 to vector<8x64xf32>
    %26 = arith.addf %25, %24 : vector<8x64xf32>
    %27 = arith.divf %25, %26 : vector<8x64xf32>
    %28 = vector.extract_strided_slice %27 {offsets = [0, 0], sizes = [8, 32], strides = [1, 1]} : vector<8x64xf32> to vector<8x32xf32>
    %29 = vector.extract_strided_slice %27 {offsets = [0, 32], sizes = [8, 32], strides = [1, 1]} : vector<8x64xf32> to vector<8x32xf32>
    %30 = vector.extract_strided_slice %17 {offsets = [0, 64], sizes = [8, 32], strides = [1, 1]} : vector<8x96xf32> to vector<8x32xf32>
    %31 = vector.extract_strided_slice %19 {offsets = [0, 64], sizes = [8, 32], strides = [1, 1]} : vector<8x96xf32> to vector<8x32xf32>
    %32 = arith.mulf %28, %31 : vector<8x32xf32>
    %33 = arith.addf %30, %32 : vector<8x32xf32>
    %34 = math.tanh %33 : vector<8x32xf32>
    %cst_18 = arith.constant 1.000000e+00 : f32
    %35 = vector.broadcast %cst_18 : f32 to vector<8x32xf32>
    %36 = arith.subf %35, %29 : vector<8x32xf32>
    %37 = arith.mulf %36, %34 : vector<8x32xf32>
    %38 = arith.mulf %29, %12 : vector<8x32xf32>
    %39 = arith.addf %37, %38 : vector<8x32xf32>
    %40 = tpu.concatenate %39, %14 in 1 : vector<8x32xf32>, vector<8x32xf32> -> vector<8x64xf32>
    %cst_19 = arith.constant dense<0.000000e+00> : vector<8x384xf32>
    %41 = tpu.matmul %40, %7, %cst_19 {dimension_numbers = #tpu.dot_dimension_numbers<[1], [0], [0], [1], [0, 0, 1, 1], [], []>} : vector<8x64xf32>, vector<64x384xf32>, vector<8x384xf32> -> vector<8x384xf32>
    %42 = vector.extract_strided_slice %6 {offsets = [8, 0], sizes = [8, 96], strides = [1, 1]} : vector<64x96xf32> to vector<8x96xf32>
    %43 = vector.extract_strided_slice %41 {offsets = [0, 0], sizes = [8, 96], strides = [1, 1]} : vector<8x384xf32> to vector<8x96xf32>
    %44 = arith.addf %43, %8 : vector<8x96xf32>
    %45 = vector.extract_strided_slice %42 {offsets = [0, 0], sizes = [8, 64], strides = [1, 1]} : vector<8x96xf32> to vector<8x64xf32>
    %46 = vector.extract_strided_slice %44 {offsets = [0, 0], sizes = [8, 64], strides = [1, 1]} : vector<8x96xf32> to vector<8x64xf32>
    %47 = arith.addf %45, %46 : vector<8x64xf32>
    %48 = arith.negf %47 : vector<8x64xf32>
    %49 = math.exp %48 : vector<8x64xf32>
    %cst_20 = arith.constant 1.000000e+00 : f32
    %50 = vector.broadcast %cst_20 : f32 to vector<8x64xf32>
    %51 = arith.addf %50, %49 : vector<8x64xf32>
    %52 = arith.divf %50, %51 : vector<8x64xf32>
    %53 = vector.extract_strided_slice %52 {offsets = [0, 0], sizes = [8, 32], strides = [1, 1]} : vector<8x64xf32> to vector<8x32xf32>
    %54 = vector.extract_strided_slice %52 {offsets = [0, 32], sizes = [8, 32], strides = [1, 1]} : vector<8x64xf32> to vector<8x32xf32>
    %55 = vector.extract_strided_slice %42 {offsets = [0, 64], sizes = [8, 32], strides = [1, 1]} : vector<8x96xf32> to vector<8x32xf32>
    %56 = vector.extract_strided_slice %44 {offsets = [0, 64], sizes = [8, 32], strides = [1, 1]} : vector<8x96xf32> to vector<8x32xf32>
    %57 = arith.mulf %53, %56 : vector<8x32xf32>
    %58 = arith.addf %55, %57 : vector<8x32xf32>
    %59 = math.tanh %58 : vector<8x32xf32>
    %cst_21 = arith.constant 1.000000e+00 : f32
    %60 = vector.broadcast %cst_21 : f32 to vector<8x32xf32>
    %61 = arith.subf %60, %54 : vector<8x32xf32>
    %62 = arith.mulf %61, %59 : vector<8x32xf32>
    %63 = arith.mulf %54, %39 : vector<8x32xf32>
    %64 = arith.addf %62, %63 : vector<8x32xf32>
    %65 = vector.extract_strided_slice %41 {offsets = [0, 128], sizes = [8, 96], strides = [1, 1]} : vector<8x384xf32> to vector<8x96xf32>
    %66 = arith.addf %65, %9 : vector<8x96xf32>
    %67 = vector.extract_strided_slice %41 {offsets = [0, 256], sizes = [8, 96], strides = [1, 1]} : vector<8x384xf32> to vector<8x96xf32>
    %68 = arith.addf %67, %10 : vector<8x96xf32>
    %69 = vector.extract_strided_slice %66 {offsets = [0, 0], sizes = [8, 64], strides = [1, 1]} : vector<8x96xf32> to vector<8x64xf32>
    %70 = vector.extract_strided_slice %68 {offsets = [0, 0], sizes = [8, 64], strides = [1, 1]} : vector<8x96xf32> to vector<8x64xf32>
    %71 = arith.addf %69, %70 : vector<8x64xf32>
    %72 = arith.negf %71 : vector<8x64xf32>
    %73 = math.exp %72 : vector<8x64xf32>
    %cst_22 = arith.constant 1.000000e+00 : f32
    %74 = vector.broadcast %cst_22 : f32 to vector<8x64xf32>
    %75 = arith.addf %74, %73 : vector<8x64xf32>
    %76 = arith.divf %74, %75 : vector<8x64xf32>
    %77 = vector.extract_strided_slice %76 {offsets = [0, 0], sizes = [8, 32], strides = [1, 1]} : vector<8x64xf32> to vector<8x32xf32>
    %78 = vector.extract_strided_slice %76 {offsets = [0, 32], sizes = [8, 32], strides = [1, 1]} : vector<8x64xf32> to vector<8x32xf32>
    %79 = vector.extract_strided_slice %66 {offsets = [0, 64], sizes = [8, 32], strides = [1, 1]} : vector<8x96xf32> to vector<8x32xf32>
    %80 = vector.extract_strided_slice %68 {offsets = [0, 64], sizes = [8, 32], strides = [1, 1]} : vector<8x96xf32> to vector<8x32xf32>
    %81 = arith.mulf %77, %80 : vector<8x32xf32>
    %82 = arith.addf %79, %81 : vector<8x32xf32>
    %83 = math.tanh %82 : vector<8x32xf32>
    %cst_23 = arith.constant 1.000000e+00 : f32
    %84 = vector.broadcast %cst_23 : f32 to vector<8x32xf32>
    %85 = arith.subf %84, %78 : vector<8x32xf32>
    %86 = arith.mulf %85, %83 : vector<8x32xf32>
    %87 = arith.mulf %78, %14 : vector<8x32xf32>
    %88 = arith.addf %86, %87 : vector<8x32xf32>
    %89 = tpu.concatenate %64, %88 in 1 : vector<8x32xf32>, vector<8x32xf32> -> vector<8x64xf32>
    %cst_24 = arith.constant dense<0.000000e+00> : vector<8x384xf32>
    %90 = tpu.matmul %89, %7, %cst_24 {dimension_numbers = #tpu.dot_dimension_numbers<[1], [0], [0], [1], [0, 0, 1, 1], [], []>} : vector<8x64xf32>, vector<64x384xf32>, vector<8x384xf32> -> vector<8x384xf32>
    %91 = vector.extract_strided_slice %6 {offsets = [16, 0], sizes = [8, 96], strides = [1, 1]} : vector<64x96xf32> to vector<8x96xf32>
    %92 = vector.extract_strided_slice %90 {offsets = [0, 0], sizes = [8, 96], strides = [1, 1]} : vector<8x384xf32> to vector<8x96xf32>
    %93 = arith.addf %92, %8 : vector<8x96xf32>
    %94 = vector.extract_strided_slice %91 {offsets = [0, 0], sizes = [8, 64], strides = [1, 1]} : vector<8x96xf32> to vector<8x64xf32>
    %95 = vector.extract_strided_slice %93 {offsets = [0, 0], sizes = [8, 64], strides = [1, 1]} : vector<8x96xf32> to vector<8x64xf32>
    %96 = arith.addf %94, %95 : vector<8x64xf32>
    %97 = arith.negf %96 : vector<8x64xf32>
    %98 = math.exp %97 : vector<8x64xf32>
    %cst_25 = arith.constant 1.000000e+00 : f32
    %99 = vector.broadcast %cst_25 : f32 to vector<8x64xf32>
    %100 = arith.addf %99, %98 : vector<8x64xf32>
    %101 = arith.divf %99, %100 : vector<8x64xf32>
    %102 = vector.extract_strided_slice %101 {offsets = [0, 0], sizes = [8, 32], strides = [1, 1]} : vector<8x64xf32> to vector<8x32xf32>
    %103 = vector.extract_strided_slice %101 {offsets = [0, 32], sizes = [8, 32], strides = [1, 1]} : vector<8x64xf32> to vector<8x32xf32>
    %104 = vector.extract_strided_slice %91 {offsets = [0, 64], sizes = [8, 32], strides = [1, 1]} : vector<8x96xf32> to vector<8x32xf32>
    %105 = vector.extract_strided_slice %93 {offsets = [0, 64], sizes = [8, 32], strides = [1, 1]} : vector<8x96xf32> to vector<8x32xf32>
    %106 = arith.mulf %102, %105 : vector<8x32xf32>
    %107 = arith.addf %104, %106 : vector<8x32xf32>
    %108 = math.tanh %107 : vector<8x32xf32>
    %cst_26 = arith.constant 1.000000e+00 : f32
    %109 = vector.broadcast %cst_26 : f32 to vector<8x32xf32>
    %110 = arith.subf %109, %103 : vector<8x32xf32>
    %111 = arith.mulf %110, %108 : vector<8x32xf32>
    %112 = arith.mulf %103, %64 : vector<8x32xf32>
    %113 = arith.addf %111, %112 : vector<8x32xf32>
    %114 = vector.extract_strided_slice %90 {offsets = [0, 128], sizes = [8, 96], strides = [1, 1]} : vector<8x384xf32> to vector<8x96xf32>
    %115 = arith.addf %114, %9 : vector<8x96xf32>
    %116 = vector.extract_strided_slice %90 {offsets = [0, 256], sizes = [8, 96], strides = [1, 1]} : vector<8x384xf32> to vector<8x96xf32>
    %117 = arith.addf %116, %10 : vector<8x96xf32>
    %118 = vector.extract_strided_slice %115 {offsets = [0, 0], sizes = [8, 64], strides = [1, 1]} : vector<8x96xf32> to vector<8x64xf32>
    %119 = vector.extract_strided_slice %117 {offsets = [0, 0], sizes = [8, 64], strides = [1, 1]} : vector<8x96xf32> to vector<8x64xf32>
    %120 = arith.addf %118, %119 : vector<8x64xf32>
    %121 = arith.negf %120 : vector<8x64xf32>
    %122 = math.exp %121 : vector<8x64xf32>
    %cst_27 = arith.constant 1.000000e+00 : f32
    %123 = vector.broadcast %cst_27 : f32 to vector<8x64xf32>
    %124 = arith.addf %123, %122 : vector<8x64xf32>
    %125 = arith.divf %123, %124 : vector<8x64xf32>
    %126 = vector.extract_strided_slice %125 {offsets = [0, 0], sizes = [8, 32], strides = [1, 1]} : vector<8x64xf32> to vector<8x32xf32>
    %127 = vector.extract_strided_slice %125 {offsets = [0, 32], sizes = [8, 32], strides = [1, 1]} : vector<8x64xf32> to vector<8x32xf32>
    %128 = vector.extract_strided_slice %115 {offsets = [0, 64], sizes = [8, 32], strides = [1, 1]} : vector<8x96xf32> to vector<8x32xf32>
    %129 = vector.extract_strided_slice %117 {offsets = [0, 64], sizes = [8, 32], strides = [1, 1]} : vector<8x96xf32> to vector<8x32xf32>
    %130 = arith.mulf %126, %129 : vector<8x32xf32>
    %131 = arith.addf %128, %130 : vector<8x32xf32>
    %132 = math.tanh %131 : vector<8x32xf32>
    %cst_28 = arith.constant 1.000000e+00 : f32
    %133 = vector.broadcast %cst_28 : f32 to vector<8x32xf32>
    %134 = arith.subf %133, %127 : vector<8x32xf32>
    %135 = arith.mulf %134, %132 : vector<8x32xf32>
    %136 = arith.mulf %127, %88 : vector<8x32xf32>
    %137 = arith.addf %135, %136 : vector<8x32xf32>
    %138 = tpu.concatenate %113, %137 in 1 : vector<8x32xf32>, vector<8x32xf32> -> vector<8x64xf32>
    %cst_29 = arith.constant dense<0.000000e+00> : vector<8x384xf32>
    %139 = tpu.matmul %138, %7, %cst_29 {dimension_numbers = #tpu.dot_dimension_numbers<[1], [0], [0], [1], [0, 0, 1, 1], [], []>} : vector<8x64xf32>, vector<64x384xf32>, vector<8x384xf32> -> vector<8x384xf32>
    %140 = vector.extract_strided_slice %6 {offsets = [24, 0], sizes = [8, 96], strides = [1, 1]} : vector<64x96xf32> to vector<8x96xf32>
    %141 = vector.extract_strided_slice %139 {offsets = [0, 0], sizes = [8, 96], strides = [1, 1]} : vector<8x384xf32> to vector<8x96xf32>
    %142 = arith.addf %141, %8 : vector<8x96xf32>
    %143 = vector.extract_strided_slice %140 {offsets = [0, 0], sizes = [8, 64], strides = [1, 1]} : vector<8x96xf32> to vector<8x64xf32>
    %144 = vector.extract_strided_slice %142 {offsets = [0, 0], sizes = [8, 64], strides = [1, 1]} : vector<8x96xf32> to vector<8x64xf32>
    %145 = arith.addf %143, %144 : vector<8x64xf32>
    %146 = arith.negf %145 : vector<8x64xf32>
    %147 = math.exp %146 : vector<8x64xf32>
    %cst_30 = arith.constant 1.000000e+00 : f32
    %148 = vector.broadcast %cst_30 : f32 to vector<8x64xf32>
    %149 = arith.addf %148, %147 : vector<8x64xf32>
    %150 = arith.divf %148, %149 : vector<8x64xf32>
    %151 = vector.extract_strided_slice %150 {offsets = [0, 0], sizes = [8, 32], strides = [1, 1]} : vector<8x64xf32> to vector<8x32xf32>
    %152 = vector.extract_strided_slice %150 {offsets = [0, 32], sizes = [8, 32], strides = [1, 1]} : vector<8x64xf32> to vector<8x32xf32>
    %153 = vector.extract_strided_slice %140 {offsets = [0, 64], sizes = [8, 32], strides = [1, 1]} : vector<8x96xf32> to vector<8x32xf32>
    %154 = vector.extract_strided_slice %142 {offsets = [0, 64], sizes = [8, 32], strides = [1, 1]} : vector<8x96xf32> to vector<8x32xf32>
    %155 = arith.mulf %151, %154 : vector<8x32xf32>
    %156 = arith.addf %153, %155 : vector<8x32xf32>
    %157 = math.tanh %156 : vector<8x32xf32>
    %cst_31 = arith.constant 1.000000e+00 : f32
    %158 = vector.broadcast %cst_31 : f32 to vector<8x32xf32>
    %159 = arith.subf %158, %152 : vector<8x32xf32>
    %160 = arith.mulf %159, %157 : vector<8x32xf32>
    %161 = arith.mulf %152, %113 : vector<8x32xf32>
    %162 = arith.addf %160, %161 : vector<8x32xf32>
    %163 = vector.extract_strided_slice %139 {offsets = [0, 128], sizes = [8, 96], strides = [1, 1]} : vector<8x384xf32> to vector<8x96xf32>
    %164 = arith.addf %163, %9 : vector<8x96xf32>
    %165 = vector.extract_strided_slice %139 {offsets = [0, 256], sizes = [8, 96], strides = [1, 1]} : vector<8x384xf32> to vector<8x96xf32>
    %166 = arith.addf %165, %10 : vector<8x96xf32>
    %167 = vector.extract_strided_slice %164 {offsets = [0, 0], sizes = [8, 64], strides = [1, 1]} : vector<8x96xf32> to vector<8x64xf32>
    %168 = vector.extract_strided_slice %166 {offsets = [0, 0], sizes = [8, 64], strides = [1, 1]} : vector<8x96xf32> to vector<8x64xf32>
    %169 = arith.addf %167, %168 : vector<8x64xf32>
    %170 = arith.negf %169 : vector<8x64xf32>
    %171 = math.exp %170 : vector<8x64xf32>
    %cst_32 = arith.constant 1.000000e+00 : f32
    %172 = vector.broadcast %cst_32 : f32 to vector<8x64xf32>
    %173 = arith.addf %172, %171 : vector<8x64xf32>
    %174 = arith.divf %172, %173 : vector<8x64xf32>
    %175 = vector.extract_strided_slice %174 {offsets = [0, 0], sizes = [8, 32], strides = [1, 1]} : vector<8x64xf32> to vector<8x32xf32>
    %176 = vector.extract_strided_slice %174 {offsets = [0, 32], sizes = [8, 32], strides = [1, 1]} : vector<8x64xf32> to vector<8x32xf32>
    %177 = vector.extract_strided_slice %164 {offsets = [0, 64], sizes = [8, 32], strides = [1, 1]} : vector<8x96xf32> to vector<8x32xf32>
    %178 = vector.extract_strided_slice %166 {offsets = [0, 64], sizes = [8, 32], strides = [1, 1]} : vector<8x96xf32> to vector<8x32xf32>
    %179 = arith.mulf %175, %178 : vector<8x32xf32>
    %180 = arith.addf %177, %179 : vector<8x32xf32>
    %181 = math.tanh %180 : vector<8x32xf32>
    %cst_33 = arith.constant 1.000000e+00 : f32
    %182 = vector.broadcast %cst_33 : f32 to vector<8x32xf32>
    %183 = arith.subf %182, %176 : vector<8x32xf32>
    %184 = arith.mulf %183, %181 : vector<8x32xf32>
    %185 = arith.mulf %176, %137 : vector<8x32xf32>
    %186 = arith.addf %184, %185 : vector<8x32xf32>
    %187 = tpu.concatenate %162, %186 in 1 : vector<8x32xf32>, vector<8x32xf32> -> vector<8x64xf32>
    %cst_34 = arith.constant dense<0.000000e+00> : vector<8x384xf32>
    %188 = tpu.matmul %187, %7, %cst_34 {dimension_numbers = #tpu.dot_dimension_numbers<[1], [0], [0], [1], [0, 0, 1, 1], [], []>} : vector<8x64xf32>, vector<64x384xf32>, vector<8x384xf32> -> vector<8x384xf32>
    %189 = vector.extract_strided_slice %6 {offsets = [32, 0], sizes = [8, 96], strides = [1, 1]} : vector<64x96xf32> to vector<8x96xf32>
    %190 = vector.extract_strided_slice %188 {offsets = [0, 0], sizes = [8, 96], strides = [1, 1]} : vector<8x384xf32> to vector<8x96xf32>
    %191 = arith.addf %190, %8 : vector<8x96xf32>
    %192 = vector.extract_strided_slice %189 {offsets = [0, 0], sizes = [8, 64], strides = [1, 1]} : vector<8x96xf32> to vector<8x64xf32>
    %193 = vector.extract_strided_slice %191 {offsets = [0, 0], sizes = [8, 64], strides = [1, 1]} : vector<8x96xf32> to vector<8x64xf32>
    %194 = arith.addf %192, %193 : vector<8x64xf32>
    %195 = arith.negf %194 : vector<8x64xf32>
    %196 = math.exp %195 : vector<8x64xf32>
    %cst_35 = arith.constant 1.000000e+00 : f32
    %197 = vector.broadcast %cst_35 : f32 to vector<8x64xf32>
    %198 = arith.addf %197, %196 : vector<8x64xf32>
    %199 = arith.divf %197, %198 : vector<8x64xf32>
    %200 = vector.extract_strided_slice %199 {offsets = [0, 0], sizes = [8, 32], strides = [1, 1]} : vector<8x64xf32> to vector<8x32xf32>
    %201 = vector.extract_strided_slice %199 {offsets = [0, 32], sizes = [8, 32], strides = [1, 1]} : vector<8x64xf32> to vector<8x32xf32>
    %202 = vector.extract_strided_slice %189 {offsets = [0, 64], sizes = [8, 32], strides = [1, 1]} : vector<8x96xf32> to vector<8x32xf32>
    %203 = vector.extract_strided_slice %191 {offsets = [0, 64], sizes = [8, 32], strides = [1, 1]} : vector<8x96xf32> to vector<8x32xf32>
    %204 = arith.mulf %200, %203 : vector<8x32xf32>
    %205 = arith.addf %202, %204 : vector<8x32xf32>
    %206 = math.tanh %205 : vector<8x32xf32>
    %cst_36 = arith.constant 1.000000e+00 : f32
    %207 = vector.broadcast %cst_36 : f32 to vector<8x32xf32>
    %208 = arith.subf %207, %201 : vector<8x32xf32>
    %209 = arith.mulf %208, %206 : vector<8x32xf32>
    %210 = arith.mulf %201, %162 : vector<8x32xf32>
    %211 = arith.addf %209, %210 : vector<8x32xf32>
    %212 = vector.extract_strided_slice %188 {offsets = [0, 128], sizes = [8, 96], strides = [1, 1]} : vector<8x384xf32> to vector<8x96xf32>
    %213 = arith.addf %212, %9 : vector<8x96xf32>
    %214 = vector.extract_strided_slice %188 {offsets = [0, 256], sizes = [8, 96], strides = [1, 1]} : vector<8x384xf32> to vector<8x96xf32>
    %215 = arith.addf %214, %10 : vector<8x96xf32>
    %216 = vector.extract_strided_slice %213 {offsets = [0, 0], sizes = [8, 64], strides = [1, 1]} : vector<8x96xf32> to vector<8x64xf32>
    %217 = vector.extract_strided_slice %215 {offsets = [0, 0], sizes = [8, 64], strides = [1, 1]} : vector<8x96xf32> to vector<8x64xf32>
    %218 = arith.addf %216, %217 : vector<8x64xf32>
    %219 = arith.negf %218 : vector<8x64xf32>
    %220 = math.exp %219 : vector<8x64xf32>
    %cst_37 = arith.constant 1.000000e+00 : f32
    %221 = vector.broadcast %cst_37 : f32 to vector<8x64xf32>
    %222 = arith.addf %221, %220 : vector<8x64xf32>
    %223 = arith.divf %221, %222 : vector<8x64xf32>
    %224 = vector.extract_strided_slice %223 {offsets = [0, 0], sizes = [8, 32], strides = [1, 1]} : vector<8x64xf32> to vector<8x32xf32>
    %225 = vector.extract_strided_slice %223 {offsets = [0, 32], sizes = [8, 32], strides = [1, 1]} : vector<8x64xf32> to vector<8x32xf32>
    %226 = vector.extract_strided_slice %213 {offsets = [0, 64], sizes = [8, 32], strides = [1, 1]} : vector<8x96xf32> to vector<8x32xf32>
    %227 = vector.extract_strided_slice %215 {offsets = [0, 64], sizes = [8, 32], strides = [1, 1]} : vector<8x96xf32> to vector<8x32xf32>
    %228 = arith.mulf %224, %227 : vector<8x32xf32>
    %229 = arith.addf %226, %228 : vector<8x32xf32>
    %230 = math.tanh %229 : vector<8x32xf32>
    %cst_38 = arith.constant 1.000000e+00 : f32
    %231 = vector.broadcast %cst_38 : f32 to vector<8x32xf32>
    %232 = arith.subf %231, %225 : vector<8x32xf32>
    %233 = arith.mulf %232, %230 : vector<8x32xf32>
    %234 = arith.mulf %225, %186 : vector<8x32xf32>
    %235 = arith.addf %233, %234 : vector<8x32xf32>
    %236 = tpu.concatenate %211, %235 in 1 : vector<8x32xf32>, vector<8x32xf32> -> vector<8x64xf32>
    %cst_39 = arith.constant dense<0.000000e+00> : vector<8x384xf32>
    %237 = tpu.matmul %236, %7, %cst_39 {dimension_numbers = #tpu.dot_dimension_numbers<[1], [0], [0], [1], [0, 0, 1, 1], [], []>} : vector<8x64xf32>, vector<64x384xf32>, vector<8x384xf32> -> vector<8x384xf32>
    %238 = vector.extract_strided_slice %6 {offsets = [40, 0], sizes = [8, 96], strides = [1, 1]} : vector<64x96xf32> to vector<8x96xf32>
    %239 = vector.extract_strided_slice %237 {offsets = [0, 0], sizes = [8, 96], strides = [1, 1]} : vector<8x384xf32> to vector<8x96xf32>
    %240 = arith.addf %239, %8 : vector<8x96xf32>
    %241 = vector.extract_strided_slice %238 {offsets = [0, 0], sizes = [8, 64], strides = [1, 1]} : vector<8x96xf32> to vector<8x64xf32>
    %242 = vector.extract_strided_slice %240 {offsets = [0, 0], sizes = [8, 64], strides = [1, 1]} : vector<8x96xf32> to vector<8x64xf32>
    %243 = arith.addf %241, %242 : vector<8x64xf32>
    %244 = arith.negf %243 : vector<8x64xf32>
    %245 = math.exp %244 : vector<8x64xf32>
    %cst_40 = arith.constant 1.000000e+00 : f32
    %246 = vector.broadcast %cst_40 : f32 to vector<8x64xf32>
    %247 = arith.addf %246, %245 : vector<8x64xf32>
    %248 = arith.divf %246, %247 : vector<8x64xf32>
    %249 = vector.extract_strided_slice %248 {offsets = [0, 0], sizes = [8, 32], strides = [1, 1]} : vector<8x64xf32> to vector<8x32xf32>
    %250 = vector.extract_strided_slice %248 {offsets = [0, 32], sizes = [8, 32], strides = [1, 1]} : vector<8x64xf32> to vector<8x32xf32>
    %251 = vector.extract_strided_slice %238 {offsets = [0, 64], sizes = [8, 32], strides = [1, 1]} : vector<8x96xf32> to vector<8x32xf32>
    %252 = vector.extract_strided_slice %240 {offsets = [0, 64], sizes = [8, 32], strides = [1, 1]} : vector<8x96xf32> to vector<8x32xf32>
    %253 = arith.mulf %249, %252 : vector<8x32xf32>
    %254 = arith.addf %251, %253 : vector<8x32xf32>
    %255 = math.tanh %254 : vector<8x32xf32>
    %cst_41 = arith.constant 1.000000e+00 : f32
    %256 = vector.broadcast %cst_41 : f32 to vector<8x32xf32>
    %257 = arith.subf %256, %250 : vector<8x32xf32>
    %258 = arith.mulf %257, %255 : vector<8x32xf32>
    %259 = arith.mulf %250, %211 : vector<8x32xf32>
    %260 = arith.addf %258, %259 : vector<8x32xf32>
    %261 = vector.extract_strided_slice %237 {offsets = [0, 128], sizes = [8, 96], strides = [1, 1]} : vector<8x384xf32> to vector<8x96xf32>
    %262 = arith.addf %261, %9 : vector<8x96xf32>
    %263 = vector.extract_strided_slice %237 {offsets = [0, 256], sizes = [8, 96], strides = [1, 1]} : vector<8x384xf32> to vector<8x96xf32>
    %264 = arith.addf %263, %10 : vector<8x96xf32>
    %265 = vector.extract_strided_slice %262 {offsets = [0, 0], sizes = [8, 64], strides = [1, 1]} : vector<8x96xf32> to vector<8x64xf32>
    %266 = vector.extract_strided_slice %264 {offsets = [0, 0], sizes = [8, 64], strides = [1, 1]} : vector<8x96xf32> to vector<8x64xf32>
    %267 = arith.addf %265, %266 : vector<8x64xf32>
    %268 = arith.negf %267 : vector<8x64xf32>
    %269 = math.exp %268 : vector<8x64xf32>
    %cst_42 = arith.constant 1.000000e+00 : f32
    %270 = vector.broadcast %cst_42 : f32 to vector<8x64xf32>
    %271 = arith.addf %270, %269 : vector<8x64xf32>
    %272 = arith.divf %270, %271 : vector<8x64xf32>
    %273 = vector.extract_strided_slice %272 {offsets = [0, 0], sizes = [8, 32], strides = [1, 1]} : vector<8x64xf32> to vector<8x32xf32>
    %274 = vector.extract_strided_slice %272 {offsets = [0, 32], sizes = [8, 32], strides = [1, 1]} : vector<8x64xf32> to vector<8x32xf32>
    %275 = vector.extract_strided_slice %262 {offsets = [0, 64], sizes = [8, 32], strides = [1, 1]} : vector<8x96xf32> to vector<8x32xf32>
    %276 = vector.extract_strided_slice %264 {offsets = [0, 64], sizes = [8, 32], strides = [1, 1]} : vector<8x96xf32> to vector<8x32xf32>
    %277 = arith.mulf %273, %276 : vector<8x32xf32>
    %278 = arith.addf %275, %277 : vector<8x32xf32>
    %279 = math.tanh %278 : vector<8x32xf32>
    %cst_43 = arith.constant 1.000000e+00 : f32
    %280 = vector.broadcast %cst_43 : f32 to vector<8x32xf32>
    %281 = arith.subf %280, %274 : vector<8x32xf32>
    %282 = arith.mulf %281, %279 : vector<8x32xf32>
    %283 = arith.mulf %274, %235 : vector<8x32xf32>
    %284 = arith.addf %282, %283 : vector<8x32xf32>
    %285 = tpu.concatenate %260, %284 in 1 : vector<8x32xf32>, vector<8x32xf32> -> vector<8x64xf32>
    %cst_44 = arith.constant dense<0.000000e+00> : vector<8x384xf32>
    %286 = tpu.matmul %285, %7, %cst_44 {dimension_numbers = #tpu.dot_dimension_numbers<[1], [0], [0], [1], [0, 0, 1, 1], [], []>} : vector<8x64xf32>, vector<64x384xf32>, vector<8x384xf32> -> vector<8x384xf32>
    %287 = vector.extract_strided_slice %6 {offsets = [48, 0], sizes = [8, 96], strides = [1, 1]} : vector<64x96xf32> to vector<8x96xf32>
    %288 = vector.extract_strided_slice %286 {offsets = [0, 0], sizes = [8, 96], strides = [1, 1]} : vector<8x384xf32> to vector<8x96xf32>
    %289 = arith.addf %288, %8 : vector<8x96xf32>
    %290 = vector.extract_strided_slice %287 {offsets = [0, 0], sizes = [8, 64], strides = [1, 1]} : vector<8x96xf32> to vector<8x64xf32>
    %291 = vector.extract_strided_slice %289 {offsets = [0, 0], sizes = [8, 64], strides = [1, 1]} : vector<8x96xf32> to vector<8x64xf32>
    %292 = arith.addf %290, %291 : vector<8x64xf32>
    %293 = arith.negf %292 : vector<8x64xf32>
    %294 = math.exp %293 : vector<8x64xf32>
    %cst_45 = arith.constant 1.000000e+00 : f32
    %295 = vector.broadcast %cst_45 : f32 to vector<8x64xf32>
    %296 = arith.addf %295, %294 : vector<8x64xf32>
    %297 = arith.divf %295, %296 : vector<8x64xf32>
    %298 = vector.extract_strided_slice %297 {offsets = [0, 0], sizes = [8, 32], strides = [1, 1]} : vector<8x64xf32> to vector<8x32xf32>
    %299 = vector.extract_strided_slice %297 {offsets = [0, 32], sizes = [8, 32], strides = [1, 1]} : vector<8x64xf32> to vector<8x32xf32>
    %300 = vector.extract_strided_slice %287 {offsets = [0, 64], sizes = [8, 32], strides = [1, 1]} : vector<8x96xf32> to vector<8x32xf32>
    %301 = vector.extract_strided_slice %289 {offsets = [0, 64], sizes = [8, 32], strides = [1, 1]} : vector<8x96xf32> to vector<8x32xf32>
    %302 = arith.mulf %298, %301 : vector<8x32xf32>
    %303 = arith.addf %300, %302 : vector<8x32xf32>
    %304 = math.tanh %303 : vector<8x32xf32>
    %cst_46 = arith.constant 1.000000e+00 : f32
    %305 = vector.broadcast %cst_46 : f32 to vector<8x32xf32>
    %306 = arith.subf %305, %299 : vector<8x32xf32>
    %307 = arith.mulf %306, %304 : vector<8x32xf32>
    %308 = arith.mulf %299, %260 : vector<8x32xf32>
    %309 = arith.addf %307, %308 : vector<8x32xf32>
    %310 = vector.extract_strided_slice %286 {offsets = [0, 128], sizes = [8, 96], strides = [1, 1]} : vector<8x384xf32> to vector<8x96xf32>
    %311 = arith.addf %310, %9 : vector<8x96xf32>
    %312 = vector.extract_strided_slice %286 {offsets = [0, 256], sizes = [8, 96], strides = [1, 1]} : vector<8x384xf32> to vector<8x96xf32>
    %313 = arith.addf %312, %10 : vector<8x96xf32>
    %314 = vector.extract_strided_slice %311 {offsets = [0, 0], sizes = [8, 64], strides = [1, 1]} : vector<8x96xf32> to vector<8x64xf32>
    %315 = vector.extract_strided_slice %313 {offsets = [0, 0], sizes = [8, 64], strides = [1, 1]} : vector<8x96xf32> to vector<8x64xf32>
    %316 = arith.addf %314, %315 : vector<8x64xf32>
    %317 = arith.negf %316 : vector<8x64xf32>
    %318 = math.exp %317 : vector<8x64xf32>
    %cst_47 = arith.constant 1.000000e+00 : f32
    %319 = vector.broadcast %cst_47 : f32 to vector<8x64xf32>
    %320 = arith.addf %319, %318 : vector<8x64xf32>
    %321 = arith.divf %319, %320 : vector<8x64xf32>
    %322 = vector.extract_strided_slice %321 {offsets = [0, 0], sizes = [8, 32], strides = [1, 1]} : vector<8x64xf32> to vector<8x32xf32>
    %323 = vector.extract_strided_slice %321 {offsets = [0, 32], sizes = [8, 32], strides = [1, 1]} : vector<8x64xf32> to vector<8x32xf32>
    %324 = vector.extract_strided_slice %311 {offsets = [0, 64], sizes = [8, 32], strides = [1, 1]} : vector<8x96xf32> to vector<8x32xf32>
    %325 = vector.extract_strided_slice %313 {offsets = [0, 64], sizes = [8, 32], strides = [1, 1]} : vector<8x96xf32> to vector<8x32xf32>
    %326 = arith.mulf %322, %325 : vector<8x32xf32>
    %327 = arith.addf %324, %326 : vector<8x32xf32>
    %328 = math.tanh %327 : vector<8x32xf32>
    %cst_48 = arith.constant 1.000000e+00 : f32
    %329 = vector.broadcast %cst_48 : f32 to vector<8x32xf32>
    %330 = arith.subf %329, %323 : vector<8x32xf32>
    %331 = arith.mulf %330, %328 : vector<8x32xf32>
    %332 = arith.mulf %323, %284 : vector<8x32xf32>
    %333 = arith.addf %331, %332 : vector<8x32xf32>
    %334 = tpu.concatenate %309, %333 in 1 : vector<8x32xf32>, vector<8x32xf32> -> vector<8x64xf32>
    %cst_49 = arith.constant dense<0.000000e+00> : vector<8x384xf32>
    %335 = tpu.matmul %334, %7, %cst_49 {dimension_numbers = #tpu.dot_dimension_numbers<[1], [0], [0], [1], [0, 0, 1, 1], [], []>} : vector<8x64xf32>, vector<64x384xf32>, vector<8x384xf32> -> vector<8x384xf32>
    %336 = vector.extract_strided_slice %6 {offsets = [56, 0], sizes = [8, 96], strides = [1, 1]} : vector<64x96xf32> to vector<8x96xf32>
    %337 = vector.extract_strided_slice %335 {offsets = [0, 0], sizes = [8, 96], strides = [1, 1]} : vector<8x384xf32> to vector<8x96xf32>
    %338 = arith.addf %337, %8 : vector<8x96xf32>
    %339 = vector.extract_strided_slice %336 {offsets = [0, 0], sizes = [8, 64], strides = [1, 1]} : vector<8x96xf32> to vector<8x64xf32>
    %340 = vector.extract_strided_slice %338 {offsets = [0, 0], sizes = [8, 64], strides = [1, 1]} : vector<8x96xf32> to vector<8x64xf32>
    %341 = arith.addf %339, %340 : vector<8x64xf32>
    %342 = arith.negf %341 : vector<8x64xf32>
    %343 = math.exp %342 : vector<8x64xf32>
    %cst_50 = arith.constant 1.000000e+00 : f32
    %344 = vector.broadcast %cst_50 : f32 to vector<8x64xf32>
    %345 = arith.addf %344, %343 : vector<8x64xf32>
    %346 = arith.divf %344, %345 : vector<8x64xf32>
    %347 = vector.extract_strided_slice %346 {offsets = [0, 0], sizes = [8, 32], strides = [1, 1]} : vector<8x64xf32> to vector<8x32xf32>
    %348 = vector.extract_strided_slice %346 {offsets = [0, 32], sizes = [8, 32], strides = [1, 1]} : vector<8x64xf32> to vector<8x32xf32>
    %349 = vector.extract_strided_slice %336 {offsets = [0, 64], sizes = [8, 32], strides = [1, 1]} : vector<8x96xf32> to vector<8x32xf32>
    %350 = vector.extract_strided_slice %338 {offsets = [0, 64], sizes = [8, 32], strides = [1, 1]} : vector<8x96xf32> to vector<8x32xf32>
    %351 = arith.mulf %347, %350 : vector<8x32xf32>
    %352 = arith.addf %349, %351 : vector<8x32xf32>
    %353 = math.tanh %352 : vector<8x32xf32>
    %cst_51 = arith.constant 1.000000e+00 : f32
    %354 = vector.broadcast %cst_51 : f32 to vector<8x32xf32>
    %355 = arith.subf %354, %348 : vector<8x32xf32>
    %356 = arith.mulf %355, %353 : vector<8x32xf32>
    %357 = arith.mulf %348, %309 : vector<8x32xf32>
    %358 = arith.addf %356, %357 : vector<8x32xf32>
    %359 = vector.extract_strided_slice %335 {offsets = [0, 128], sizes = [8, 96], strides = [1, 1]} : vector<8x384xf32> to vector<8x96xf32>
    %360 = arith.addf %359, %9 : vector<8x96xf32>
    %361 = vector.extract_strided_slice %335 {offsets = [0, 256], sizes = [8, 96], strides = [1, 1]} : vector<8x384xf32> to vector<8x96xf32>
    %362 = arith.addf %361, %10 : vector<8x96xf32>
    %363 = vector.extract_strided_slice %360 {offsets = [0, 0], sizes = [8, 64], strides = [1, 1]} : vector<8x96xf32> to vector<8x64xf32>
    %364 = vector.extract_strided_slice %362 {offsets = [0, 0], sizes = [8, 64], strides = [1, 1]} : vector<8x96xf32> to vector<8x64xf32>
    %365 = arith.addf %363, %364 : vector<8x64xf32>
    %366 = arith.negf %365 : vector<8x64xf32>
    %367 = math.exp %366 : vector<8x64xf32>
    %cst_52 = arith.constant 1.000000e+00 : f32
    %368 = vector.broadcast %cst_52 : f32 to vector<8x64xf32>
    %369 = arith.addf %368, %367 : vector<8x64xf32>
    %370 = arith.divf %368, %369 : vector<8x64xf32>
    %371 = vector.extract_strided_slice %370 {offsets = [0, 0], sizes = [8, 32], strides = [1, 1]} : vector<8x64xf32> to vector<8x32xf32>
    %372 = vector.extract_strided_slice %370 {offsets = [0, 32], sizes = [8, 32], strides = [1, 1]} : vector<8x64xf32> to vector<8x32xf32>
    %373 = vector.extract_strided_slice %360 {offsets = [0, 64], sizes = [8, 32], strides = [1, 1]} : vector<8x96xf32> to vector<8x32xf32>
    %374 = vector.extract_strided_slice %362 {offsets = [0, 64], sizes = [8, 32], strides = [1, 1]} : vector<8x96xf32> to vector<8x32xf32>
    %375 = arith.mulf %371, %374 : vector<8x32xf32>
    %376 = arith.addf %373, %375 : vector<8x32xf32>
    %377 = math.tanh %376 : vector<8x32xf32>
    %cst_53 = arith.constant 1.000000e+00 : f32
    %378 = vector.broadcast %cst_53 : f32 to vector<8x32xf32>
    %379 = arith.subf %378, %372 : vector<8x32xf32>
    %380 = arith.mulf %379, %377 : vector<8x32xf32>
    %381 = arith.mulf %372, %333 : vector<8x32xf32>
    %382 = arith.addf %380, %381 : vector<8x32xf32>
    %383 = tpu.concatenate %358, %382 in 1 : vector<8x32xf32>, vector<8x32xf32> -> vector<8x64xf32>
    %cst_54 = arith.constant dense<0.000000e+00> : vector<8x384xf32>
    %384 = tpu.matmul %383, %7, %cst_54 {dimension_numbers = #tpu.dot_dimension_numbers<[1], [0], [0], [1], [0, 0, 1, 1], [], []>} : vector<8x64xf32>, vector<64x384xf32>, vector<8x384xf32> -> vector<8x384xf32>
    %385 = vector.extract_strided_slice %384 {offsets = [0, 128], sizes = [8, 96], strides = [1, 1]} : vector<8x384xf32> to vector<8x96xf32>
    %386 = arith.addf %385, %9 : vector<8x96xf32>
    %387 = vector.extract_strided_slice %384 {offsets = [0, 256], sizes = [8, 96], strides = [1, 1]} : vector<8x384xf32> to vector<8x96xf32>
    %388 = arith.addf %387, %10 : vector<8x96xf32>
    %389 = vector.extract_strided_slice %386 {offsets = [0, 0], sizes = [8, 64], strides = [1, 1]} : vector<8x96xf32> to vector<8x64xf32>
    %390 = vector.extract_strided_slice %388 {offsets = [0, 0], sizes = [8, 64], strides = [1, 1]} : vector<8x96xf32> to vector<8x64xf32>
    %391 = arith.addf %389, %390 : vector<8x64xf32>
    %392 = arith.negf %391 : vector<8x64xf32>
    %393 = math.exp %392 : vector<8x64xf32>
    %cst_55 = arith.constant 1.000000e+00 : f32
    %394 = vector.broadcast %cst_55 : f32 to vector<8x64xf32>
    %395 = arith.addf %394, %393 : vector<8x64xf32>
    %396 = arith.divf %394, %395 : vector<8x64xf32>
    %397 = vector.extract_strided_slice %396 {offsets = [0, 0], sizes = [8, 32], strides = [1, 1]} : vector<8x64xf32> to vector<8x32xf32>
    %398 = vector.extract_strided_slice %396 {offsets = [0, 32], sizes = [8, 32], strides = [1, 1]} : vector<8x64xf32> to vector<8x32xf32>
    %399 = vector.extract_strided_slice %386 {offsets = [0, 64], sizes = [8, 32], strides = [1, 1]} : vector<8x96xf32> to vector<8x32xf32>
    %400 = vector.extract_strided_slice %388 {offsets = [0, 64], sizes = [8, 32], strides = [1, 1]} : vector<8x96xf32> to vector<8x32xf32>
    %401 = arith.mulf %397, %400 : vector<8x32xf32>
    %402 = arith.addf %399, %401 : vector<8x32xf32>
    %403 = math.tanh %402 : vector<8x32xf32>
    %cst_56 = arith.constant 1.000000e+00 : f32
    %404 = vector.broadcast %cst_56 : f32 to vector<8x32xf32>
    %405 = arith.subf %404, %398 : vector<8x32xf32>
    %406 = arith.mulf %405, %403 : vector<8x32xf32>
    %407 = arith.mulf %398, %382 : vector<8x32xf32>
    %408 = arith.addf %406, %407 : vector<8x32xf32>
    %c0_57 = arith.constant 0 : index
    %c0_58 = arith.constant 0 : index
    %c0_59 = arith.constant 0 : index
    %409 = vector.load %arg6[%c0_57, %c0_58, %c0_59] : memref<2x8x32xf32, #tpu.memory_space<vmem>>, vector<1x8x32xf32>
    %410 = vector.shape_cast %409 : vector<1x8x32xf32> to vector<8x32xf32>
    %411 = vector.shape_cast %358 : vector<8x32xf32> to vector<1x8x32xf32>
    tpu.vector_store %arg6[%c0_57, %c0_58, %c0_59], %411 {strides = array<i32>} : memref<2x8x32xf32, #tpu.memory_space<vmem>>, vector<1x8x32xf32>,
    %c1_60 = arith.constant 1 : index
    %c0_61 = arith.constant 0 : index
    %c0_62 = arith.constant 0 : index
    %412 = vector.load %arg6[%c1_60, %c0_61, %c0_62] : memref<2x8x32xf32, #tpu.memory_space<vmem>>, vector<1x8x32xf32>
    %413 = vector.shape_cast %412 : vector<1x8x32xf32> to vector<8x32xf32>
    %414 = vector.shape_cast %408 : vector<8x32xf32> to vector<1x8x32xf32>
    tpu.vector_store %arg6[%c1_60, %c0_61, %c0_62], %414 {strides = array<i32>} : memref<2x8x32xf32, #tpu.memory_space<vmem>>, vector<1x8x32xf32>,
    %415 = tpu.concatenate %88, %137, %186, %235, %284, %333, %382, %408 in 1 : vector<8x32xf32>, vector<8x32xf32>, vector<8x32xf32>, vector<8x32xf32>, vector<8x32xf32>, vector<8x32xf32>, vector<8x32xf32>, vector<8x32xf32> -> vector<8x256xf32>
    %c0_63 = arith.constant 0 : index
    %c0_64 = arith.constant 0 : index
    %416 = vector.load %arg4[%c0_63, %c0_64] : memref<257x256xf32, #tpu.memory_space<vmem>>, vector<256x256xf32>
    %cst_65 = arith.constant dense<0.000000e+00> : vector<8x256xf32>
    %417 = tpu.matmul %415, %416, %cst_65 {dimension_numbers = #tpu.dot_dimension_numbers<[1], [0], [0], [1], [0, 0, 1, 1], [], []>} : vector<8x256xf32>, vector<256x256xf32>, vector<8x256xf32> -> vector<8x256xf32>
    %c256 = arith.constant 256 : index
    %c0_66 = arith.constant 0 : index
    %418 = vector.load %arg4[%c256, %c0_66] : memref<257x256xf32, #tpu.memory_space<vmem>>, vector<1x256xf32>
    %419 = vector.broadcast %418 : vector<1x256xf32> to vector<8x256xf32>
    %420 = arith.addf %417, %419 : vector<8x256xf32>
    %c0_67 = arith.constant 0 : index
    %c0_68 = arith.constant 0 : index
    %421 = vector.load %arg5[%c0_67, %c0_68] : memref<8x256xf32, #tpu.memory_space<vmem>>, vector<8x256xf32>
    tpu.vector_store %arg5[%c0_67, %c0_68], %420 {strides = array<i32>} : memref<8x256xf32, #tpu.memory_space<vmem>>, vector<8x256xf32>,
    return
  }
}

</mosaic_0001>

<llo_original>
// kernel: decoder_forward.1
$region0: #{decoder_forward.1}
  #allocation0 [shape = 'u32[]', space=smem, size = 0x4, offset = 0x4, fixed_abs, tag = 'smem constant byte address 0x4 - core index']
  #allocation1 [shape = 'u32[144,128]{1,0:T(1,128)}', space=vmem, size = 0x12000, scoped, tag = 'internal scratch']
  %s0 = inlined_call_operand.vmem [shape: f32[64,96], index: 0, kind: input, shape index: {}]
  %s1 = inlined_call_operand.vmem [shape: f32[2,8,32], index: 1, kind: input, shape index: {}]
  %s2 = inlined_call_operand.hbm [shape: f32[96,384], index: 2, kind: input, shape index: {}]
  %s3 = inlined_call_operand.hbm [shape: f32[24,96], index: 3, kind: input, shape index: {}]
  %s4 = inlined_call_operand.vmem [shape: f32[257,256], index: 4, kind: input, shape index: {}]
  %s5 = inlined_call_operand.vmem [shape: f32[8,256], index: 5, kind: output, shape index: {0}]
  %s6 = inlined_call_operand.vmem [shape: f32[2,8,32], index: 6, kind: output, shape index: {1}]
  %7 = xla_tuple %s5, %s6
  %s8 = sld [smem:[#allocation0]]
  $region46: #{decoder_forward.1} parent=0
    _
  %s10 = ssub.s32 1, %s8
  %s11 = scalar_select 0, %s10, %s8
  $region1: #{decoder_forward.1} parent=0
    #allocation2 [shape = 'u8[147456]{0}', space=vmem, size = 0x24000, scoped, tag = 'input window, operand 2, single buffered']
    #allocation3 [shape = 's32[1]{0}', space=sflag, size = 0x4, scoped, tag = 'scoped memory for decoder_forward.1']
    #allocation4 [shape = 'u8[12288]{0}', space=vmem, size = 0x3000, scoped, tag = 'input window, operand 3, single buffered']
    #allocation5 [shape = 's32[1]{0}', space=sflag, size = 0x4, scoped, tag = 'scoped memory for decoder_forward.1']
    %12 = vsyncpa [#allocation3], 0
    %13 = vsyncpa [#allocation5], 0
    // Predicated region
    $region2: #{decoder_forward.1} parent=1 // pred_check
      _
    $region3: #{decoder_forward.1} parent=1 // pred_check_branch
      %15 = sbr.rel (0) target = $region5
    $region4: #{decoder_forward.1} parent=1 // pred_region
      _
    $region5: #{decoder_forward.1} parent=1 // pred_fallthru
      _
    // Predicated region
    $region6: #{decoder_forward.1} parent=1 // pred_check
      _
    $region7: #{decoder_forward.1} parent=1 // pred_check_branch
      %17 = sbr.rel (0) target = $region9
    $region8: #{decoder_forward.1} parent=1 // pred_region
      _
    $region9: #{decoder_forward.1} parent=1 // pred_fallthru
      _
    // Predicated region
    $region10: #{decoder_forward.1} parent=1 // pred_check
      _
    $region11: #{decoder_forward.1} parent=1 // pred_check_branch
      %19 = sbr.rel (0) target = $region13
    $region12: #{decoder_forward.1} parent=1 // pred_region
      %s21 = ssub.s32 4608, 4608
      %22 = vsyncadd [#allocation3], %s21
      %s23 = sshll.u32 [#allocation2], 4
      %s24 = int_to_ptr.vmem [resolvable:$true] %s23
      %29 = dma.hbm_to_vmem [thread:$0]  %s2, 4608, %s24, [#allocation3], 384, 384, 24
    $region13: #{decoder_forward.1} parent=1 // pred_fallthru
      _
    // Predicated region
    $region14: #{decoder_forward.1} parent=1 // pred_check
      _
    $region15: #{decoder_forward.1} parent=1 // pred_check_branch
      %31 = sbr.rel (0) target = $region17
    $region16: #{decoder_forward.1} parent=1 // pred_region
      %s33 = ssub.s32 384, 384
      %34 = vsyncadd [#allocation5], %s33
      %s35 = sshll.u32 [#allocation4], 4
      %s36 = int_to_ptr.vmem [resolvable:$true] %s35
      %41 = dma.hbm_to_vmem [thread:$0]  %s3, 384, %s36, [#allocation5], 128, 128, 8
    $region17: #{decoder_forward.1} parent=1 // pred_fallthru
      _
    // Predicated region
    $region18: #{decoder_forward.1} parent=1 // pred_check
      _
    $region19: #{decoder_forward.1} parent=1 // pred_check_branch
      %43 = sbr.rel (0) target = $region21
    $region20: #{decoder_forward.1} parent=1 // pred_region
      _
    $region21: #{decoder_forward.1} parent=1 // pred_fallthru
      _
    // Predicated region
    $region22: #{decoder_forward.1} parent=1 // pred_check
      _
    $region23: #{decoder_forward.1} parent=1 // pred_check_branch
      %45 = sbr.rel (0) target = $region25
    $region24: #{decoder_forward.1} parent=1 // pred_region
      %46 = dma.done [#allocation3], 4608
    $region25: #{decoder_forward.1} parent=1 // pred_fallthru
      _
    // Predicated region
    $region26: #{decoder_forward.1} parent=1 // pred_check
      _
    $region27: #{decoder_forward.1} parent=1 // pred_check_branch
      %48 = sbr.rel (0) target = $region29
    $region28: #{decoder_forward.1} parent=1 // pred_region
      %49 = dma.done [#allocation5], 384
    $region29: #{decoder_forward.1} parent=1 // pred_fallthru
      _
    %v50 = vld [vmem:[#allocation2 + $0xc0] sm:$0xff]
    %v51 = vld [vmem:[#allocation2 + $0xd8] sm:$0xff]
    %v52 = vld [vmem:[#allocation2 + $0xf0] sm:$0xff]
    %v53 = vld [vmem:[#allocation2 + $0x108] sm:$0xff]
    %s54 = scalar_lea.vmem %s1, 8
    %v55 = vld [vmem:[%s54] sm:$0xff]
    %vm56 = vcmask 261120
    %v58 = vsel %vm56, %v55, 0
    %60 = vmatprep.subr.mxu0 0.0
    %61 = vmatpush1.msra.mxu0 %v50
    %62 = vmatprep.subr.mxu0 0.0
    %63 = vmatpush1.msra.mxu0 %v51
    %64 = vmatprep.subr.mxu0 0.0
    %65 = vmatpush1.msra.mxu0 %v52
    %66 = vmatprep.subr.mxu0 0.0
    %67 = vmatpush1.msra.mxu0 %v53
    %68 = vmatprep.subr.mxu0 0.0
    %69 = vmatpush1.msra.mxu0 0.0
    %70 = vmatprep.subr.mxu0 0.0
    %71 = vmatpush1.msra.mxu0 0.0
    %72 = vmatprep.subr.mxu0 0.0
    %73 = vmatpush1.msra.mxu0 0.0
    %74 = vmatprep.subr.mxu0 0.0
    %75 = vmatpush1.msra.mxu0 0.0
    %76 = vmatprep.subr.mxu0 0.0
    %77 = vmatpush1.msra.mxu0 0.0
    %78 = vmatprep.subr.mxu0 0.0
    %79 = vmatpush1.msra.mxu0 0.0
    %80 = vmatprep.subr.mxu0 0.0
    %81 = vmatpush1.msra.mxu0 0.0
    %82 = vmatprep.subr.mxu0 0.0
    %83 = vmatpush1.msra.mxu0 0.0
    %84 = vmatprep.subr.mxu0 0.0
    %85 = vmatpush1.msra.mxu0 0.0
    %86 = vmatprep.subr.mxu0 0.0
    %87 = vmatpush1.msra.mxu0 0.0
    %88 = vmatprep.subr.mxu0 0.0
    %89 = vmatpush1.msra.mxu0 0.0
    %90 = vmatprep.subr.mxu0 0.0
    %91 = vmatpush1.msra.mxu0 0.0
    %92 = vmatprep.subr.mxu0 0.0
    %93 = vmatpush1.msra.mxu0 0.0
    %94 = vmatprep.subr.mxu0 0.0
    %95 = vmatpush1.msra.mxu0 0.0
    %96 = vmatprep.subr.mxu0 0.0
    %97 = vmatpush1.msra.mxu0 0.0
    %98 = vmatprep.subr.mxu0 0.0
    %99 = vmatpush1.msra.mxu0 0.0
    %100 = vmatprep.subr.mxu0 0.0
    %101 = vmatpush1.msra.mxu0 0.0
    %102 = vmatprep.subr.mxu0 0.0
    %103 = vmatpush1.msra.mxu0 0.0
    %104 = vmatprep.subr.mxu0 0.0
    %105 = vmatpush1.msra.mxu0 0.0
    %106 = vmatprep.subr.mxu0 0.0
    %107 = vmatpush1.msra.mxu0 0.0
    %108 = vmatprep.subr.mxu0 0.0
    %109 = vmatpush1.msra.mxu0 0.0
    %110 = vmatprep.subr.mxu0 0.0
    %111 = vmatpush1.msra.mxu0 0.0
    %112 = vmatprep.subr.mxu0 0.0
    %113 = vmatpush1.msra.mxu0 0.0
    %114 = vmatprep.subr.mxu0 0.0
    %115 = vmatpush1.msra.mxu0 0.0
    %116 = vmatprep.subr.mxu0 0.0
    %117 = vmatpush1.msra.mxu0 0.0
    %118 = vmatprep.subr.mxu0 0.0
    %119 = vmatpush1.msra.mxu0 0.0
    %120 = vmatprep.subr.mxu0 0.0
    %121 = vmatpush1.msra.mxu0 0.0
    %122 = vmatprep.subr.mxu0 0.0
    %123 = vmatpush1.msra.mxu0 0.0
    %124 = vmatprep.mubr.f32.mxu0 0.0
    %125 = vmatmul.mubr.f32.gmra.mrb[0].mxu0 %v58
    %v126 = vpop.f32.mrb[0].mxu0
    %v127 = vadd.f32 0.0, %v126
    %v128 = vpop.f32.mrb[0].mxu0
    %129 = vdwg.mxu0
    %v130 = vld [vmem:[%s0] sm:$0xff]
    %v131 = vld [vmem:[%s0 + $0x8] sm:$0xff]
    %v132 = vld [vmem:[%s0 + $0x10] sm:$0xff]
    %v133 = vld [vmem:[%s0 + $0x18] sm:$0xff]
    %v134 = vld [vmem:[%s0 + $0x20] sm:$0xff]
    %v135 = vld [vmem:[%s0 + $0x28] sm:$0xff]
    %v136 = vld [vmem:[%s0 + $0x30] sm:$0xff]
    %v137 = vld [vmem:[%s0 + $0x38] sm:$0xff]
    %v138 = vadd.f32 %v130, %v127
    %v139 = vadd.f32 %v131, %v127
    %v140 = vadd.f32 %v132, %v127
    %v141 = vadd.f32 %v133, %v127
    %v142 = vadd.f32 %v134, %v127
    %v143 = vadd.f32 %v135, %v127
    %v144 = vadd.f32 %v136, %v127
    %v145 = vadd.f32 %v137, %v127
    %v146 = vld [vmem:[#allocation2] sm:$0xff]
    %v147 = vld [vmem:[#allocation2 + $0x8] sm:$0xff]
    %v148 = vld [vmem:[#allocation2 + $0x10] sm:$0xff]
    %v149 = vld [vmem:[#allocation2 + $0x18] sm:$0xff]
    %v150 = vld [vmem:[#allocation2 + $0x20] sm:$0xff]
    %v151 = vld [vmem:[#allocation2 + $0x28] sm:$0xff]
    %v152 = vld [vmem:[#allocation2 + $0x30] sm:$0xff]
    %v153 = vld [vmem:[#allocation2 + $0x38] sm:$0xff]
    %v154 = vld [vmem:[#allocation2 + $0x40] sm:$0xff]
    %v155 = vld [vmem:[#allocation2 + $0x48] sm:$0xff]
    %v156 = vld [vmem:[#allocation2 + $0x50] sm:$0xff]
    %v157 = vld [vmem:[#allocation2 + $0x58] sm:$0xff]
    %v158 = vld [vmem:[#allocation2 + $0x60] sm:$0xff]
    %v159 = vld [vmem:[#allocation2 + $0x68] sm:$0xff]
    %v160 = vld [vmem:[#allocation2 + $0x70] sm:$0xff]
    %v161 = vld [vmem:[#allocation2 + $0x78] sm:$0xff]
    %v162 = vld [vmem:[#allocation2 + $0x80] sm:$0xff]
    %v163 = vld [vmem:[#allocation2 + $0x88] sm:$0xff]
    %v164 = vld [vmem:[#allocation2 + $0x90] sm:$0xff]
    %v165 = vld [vmem:[#allocation2 + $0x98] sm:$0xff]
    %v166 = vld [vmem:[#allocation2 + $0xa0] sm:$0xff]
    %v167 = vld [vmem:[#allocation2 + $0xa8] sm:$0xff]
    %v168 = vld [vmem:[#allocation2 + $0xb0] sm:$0xff]
    %v169 = vld [vmem:[#allocation2 + $0xb8] sm:$0xff]
    %v170 = vld [vmem:[#allocation4] sm:$0xff]
    %v171 = vld [vmem:[#allocation4 + $0x8] sm:$0xff]
    %v172 = vld [vmem:[#allocation4 + $0x10] sm:$0xff]
    %v173 = vld [vmem:[%s1] sm:$0xff]
    %174 = vrot.lane.b32.xlu0 %v55, 32
    %v175 = vpop.permute.xlu0 %174
    %v177 = vsel %vm56, %v173, %v175
    %vm178 = vcmask 523264
    %v180 = vsel %vm178, %v177, 0
    %182 = vmatprep.subr.mxu0 %v147
    %183 = vmatpush1.msra.mxu0 %v146
    %184 = vmatprep.subr.mxu0 %v150
    %185 = vmatpush1.msra.mxu0 %v149
    %186 = vmatprep.subr.mxu0 %v153
    %187 = vmatpush1.msra.mxu0 %v152
    %188 = vmatprep.subr.mxu0 %v156
    %189 = vmatpush1.msra.mxu0 %v155
    %190 = vmatprep.subr.mxu0 %v159
    %191 = vmatpush1.msra.mxu0 %v158
    %192 = vmatprep.subr.mxu0 %v162
    %193 = vmatpush1.msra.mxu0 %v161
    %194 = vmatprep.subr.mxu0 %v165
    %195 = vmatpush1.msra.mxu0 %v164
    %196 = vmatprep.subr.mxu0 %v168
    %197 = vmatpush1.msra.mxu0 %v167
    %198 = vmatprep.subr.mxu0 0.0
    %199 = vmatpush1.msra.mxu0 0.0
    %200 = vmatprep.subr.mxu0 0.0
    %201 = vmatpush1.msra.mxu0 0.0
    %202 = vmatprep.subr.mxu0 0.0
    %203 = vmatpush1.msra.mxu0 0.0
    %204 = vmatprep.subr.mxu0 0.0
    %205 = vmatpush1.msra.mxu0 0.0
    %206 = vmatprep.subr.mxu0 0.0
    %207 = vmatpush1.msra.mxu0 0.0
    %208 = vmatprep.subr.mxu0 0.0
    %209 = vmatpush1.msra.mxu0 0.0
    %210 = vmatprep.subr.mxu0 0.0
    %211 = vmatpush1.msra.mxu0 0.0
    %212 = vmatprep.subr.mxu0 0.0
    %213 = vmatpush1.msra.mxu0 0.0
    %214 = vmatprep.subr.mxu0 0.0
    %215 = vmatpush1.msra.mxu0 0.0
    %216 = vmatprep.subr.mxu0 0.0
    %217 = vmatpush1.msra.mxu0 0.0
    %218 = vmatprep.subr.mxu0 0.0
    %219 = vmatpush1.msra.mxu0 0.0
    %220 = vmatprep.subr.mxu0 0.0
    %221 = vmatpush1.msra.mxu0 0.0
    %222 = vmatprep.subr.mxu0 0.0
    %223 = vmatpush1.msra.mxu0 0.0
    %224 = vmatprep.subr.mxu0 0.0
    %225 = vmatpush1.msra.mxu0 0.0
    %226 = vmatprep.subr.mxu0 0.0
    %227 = vmatpush1.msra.mxu0 0.0
    %228 = vmatprep.subr.mxu0 0.0
    %229 = vmatpush1.msra.mxu0 0.0
    %230 = vmatprep.subr.mxu0 0.0
    %231 = vmatpush1.msra.mxu0 0.0
    %232 = vmatprep.subr.mxu0 0.0
    %233 = vmatpush1.msra.mxu0 0.0
    %234 = vmatprep.subr.mxu0 0.0
    %235 = vmatpush1.msra.mxu0 0.0
    %236 = vmatprep.subr.mxu0 0.0
    %237 = vmatpush1.msra.mxu0 0.0
    %238 = vmatprep.subr.mxu0 0.0
    %239 = vmatpush1.msra.mxu0 0.0
    %240 = vmatprep.subr.mxu0 0.0
    %241 = vmatpush1.msra.mxu0 0.0
    %242 = vmatprep.subr.mxu0 0.0
    %243 = vmatpush1.msra.mxu0 0.0
    %244 = vmatprep.subr.mxu0 0.0
    %245 = vmatpush1.msra.mxu0 0.0
    %246 = vmatprep.mubr.f32.mxu0 0.0
    %247 = vmatmul.mubr.f32.gmra.mrb[0].mxu0 %v180
    %v248 = vpop.f32.mrb[0].mxu0
    %v249 = vadd.f32 0.0, %v248
    %v250 = vpop.f32.mrb[0].mxu0
    %251 = vdwg.mxu0
    %v252 = vadd.f32 %v249, %v170
    %v253 = vadd.f32 %v138, %v252
    %v254 = vxor.u32 %v253, 2147483648
    %v255 = vmul.f32 %v254, 1.442695
    %v256 = vpow.pop %v255
    %v257 = vadd.f32 %v256, 1.0
    %v258 = vrcp.pop %v257
    %v259 = vmul.f32 1.0, %v258
    %261 = vrot.lane.b32.xlu0 %v252, 64
    %v262 = vpop.permute.xlu0 %261
    %v264 = vmul.f32 %v259, %v262
    %266 = vrot.lane.b32.xlu0 %v264, 64
    %v267 = vpop.permute.xlu0 %266
    %v269 = vadd.f32 %v138, %v267
    %v270 = vtanh.pop %v269
    %v271 = vsub.f32 1.0, %v259
    %273 = vrot.lane.b32.xlu0 %v270, 96
    %v274 = vpop.permute.xlu0 %273
    %v276 = vmul.f32 %v271, %v274
    %278 = vrot.lane.b32.xlu0 %v173, 32
    %v279 = vpop.permute.xlu0 %278
    %v281 = vmul.f32 %v259, %v279
    %v282 = vadd.f32 %v276, %v281
    %284 = vrot.lane.b32.xlu0 %v282, 96
    %v285 = vpop.permute.xlu0 %284
    %v287 = vsel %vm56, %v285, %v175
    %v289 = vsel %vm178, %v287, 0
    %291 = vmatprep.subr.mxu0 %v147
    %292 = vmatpush1.msra.mxu0 %v146
    %293 = vmatprep.subr.mxu0 %v150
    %294 = vmatpush1.msra.mxu0 %v149
    %295 = vmatprep.subr.mxu0 %v153
    %296 = vmatpush1.msra.mxu0 %v152
    %297 = vmatprep.subr.mxu0 %v156
    %298 = vmatpush1.msra.mxu0 %v155
    %299 = vmatprep.subr.mxu0 %v159
    %300 = vmatpush1.msra.mxu0 %v158
    %301 = vmatprep.subr.mxu0 %v162
    %302 = vmatpush1.msra.mxu0 %v161
    %303 = vmatprep.subr.mxu0 %v165
    %304 = vmatpush1.msra.mxu0 %v164
    %305 = vmatprep.subr.mxu0 %v168
    %306 = vmatpush1.msra.mxu0 %v167
    %307 = vmatprep.subr.mxu0 0.0
    %308 = vmatpush1.msra.mxu0 0.0
    %309 = vmatprep.subr.mxu0 0.0
    %310 = vmatpush1.msra.mxu0 0.0
    %311 = vmatprep.subr.mxu0 0.0
    %312 = vmatpush1.msra.mxu0 0.0
    %313 = vmatprep.subr.mxu0 0.0
    %314 = vmatpush1.msra.mxu0 0.0
    %315 = vmatprep.subr.mxu0 0.0
    %316 = vmatpush1.msra.mxu0 0.0
    %317 = vmatprep.subr.mxu0 0.0
    %318 = vmatpush1.msra.mxu0 0.0
    %319 = vmatprep.subr.mxu0 0.0
    %320 = vmatpush1.msra.mxu0 0.0
    %321 = vmatprep.subr.mxu0 0.0
    %322 = vmatpush1.msra.mxu0 0.0
    %323 = vmatprep.subr.mxu0 0.0
    %324 = vmatpush1.msra.mxu0 0.0
    %325 = vmatprep.subr.mxu0 0.0
    %326 = vmatpush1.msra.mxu0 0.0
    %327 = vmatprep.subr.mxu0 0.0
    %328 = vmatpush1.msra.mxu0 0.0
    %329 = vmatprep.subr.mxu0 0.0
    %330 = vmatpush1.msra.mxu0 0.0
    %331 = vmatprep.subr.mxu0 0.0
    %332 = vmatpush1.msra.mxu0 0.0
    %333 = vmatprep.subr.mxu0 0.0
    %334 = vmatpush1.msra.mxu0 0.0
    %335 = vmatprep.subr.mxu0 0.0
    %336 = vmatpush1.msra.mxu0 0.0
    %337 = vmatprep.subr.mxu0 0.0
    %338 = vmatpush1.msra.mxu0 0.0
    %339 = vmatprep.subr.mxu0 0.0
    %340 = vmatpush1.msra.mxu0 0.0
    %341 = vmatprep.subr.mxu0 0.0
    %342 = vmatpush1.msra.mxu0 0.0
    %343 = vmatprep.subr.mxu0 0.0
    %344 = vmatpush1.msra.mxu0 0.0
    %345 = vmatprep.subr.mxu0 0.0
    %346 = vmatpush1.msra.mxu0 0.0
    %347 = vmatprep.subr.mxu0 0.0
    %348 = vmatpush1.msra.mxu0 0.0
    %349 = vmatprep.subr.mxu0 0.0
    %350 = vmatpush1.msra.mxu0 0.0
    %351 = vmatprep.subr.mxu0 0.0
    %352 = vmatpush1.msra.mxu0 0.0
    %353 = vmatprep.subr.mxu0 0.0
    %354 = vmatpush1.msra.mxu0 0.0
    %355 = vmatprep.mubr.f32.mxu0 0.0
    %356 = vmatmul.mubr.f32.gmra.mrb[0].mxu0 %v289
    %v357 = vpop.f32.mrb[0].mxu0
    %v358 = vadd.f32 0.0, %v357
    %v359 = vpop.f32.mrb[0].mxu0
    %v360 = vadd.f32 0.0, %v359
    %361 = vdwg.mxu0
    %362 = vmatprep.subr.mxu0 0.0
    %363 = vmatpush1.msra.mxu0 %v148
    %364 = vmatprep.subr.mxu0 0.0
    %365 = vmatpush1.msra.mxu0 %v151
    %366 = vmatprep.subr.mxu0 0.0
    %367 = vmatpush1.msra.mxu0 %v154
    %368 = vmatprep.subr.mxu0 0.0
    %369 = vmatpush1.msra.mxu0 %v157
    %370 = vmatprep.subr.mxu0 0.0
    %371 = vmatpush1.msra.mxu0 %v160
    %372 = vmatprep.subr.mxu0 0.0
    %373 = vmatpush1.msra.mxu0 %v163
    %374 = vmatprep.subr.mxu0 0.0
    %375 = vmatpush1.msra.mxu0 %v166
    %376 = vmatprep.subr.mxu0 0.0
    %377 = vmatpush1.msra.mxu0 %v169
    %378 = vmatprep.subr.mxu0 0.0
    %379 = vmatpush1.msra.mxu0 0.0
    %380 = vmatprep.subr.mxu0 0.0
    %381 = vmatpush1.msra.mxu0 0.0
    %382 = vmatprep.subr.mxu0 0.0
    %383 = vmatpush1.msra.mxu0 0.0
    %384 = vmatprep.subr.mxu0 0.0
    %385 = vmatpush1.msra.mxu0 0.0
    %386 = vmatprep.subr.mxu0 0.0
    %387 = vmatpush1.msra.mxu0 0.0
    %388 = vmatprep.subr.mxu0 0.0
    %389 = vmatpush1.msra.mxu0 0.0
    %390 = vmatprep.subr.mxu0 0.0
    %391 = vmatpush1.msra.mxu0 0.0
    %392 = vmatprep.subr.mxu0 0.0
    %393 = vmatpush1.msra.mxu0 0.0
    %394 = vmatprep.subr.mxu0 0.0
    %395 = vmatpush1.msra.mxu0 0.0
    %396 = vmatprep.subr.mxu0 0.0
    %397 = vmatpush1.msra.mxu0 0.0
    %398 = vmatprep.subr.mxu0 0.0
    %399 = vmatpush1.msra.mxu0 0.0
    %400 = vmatprep.subr.mxu0 0.0
    %401 = vmatpush1.msra.mxu0 0.0
    %402 = vmatprep.subr.mxu0 0.0
    %403 = vmatpush1.msra.mxu0 0.0
    %404 = vmatprep.subr.mxu0 0.0
    %405 = vmatpush1.msra.mxu0 0.0
    %406 = vmatprep.subr.mxu0 0.0
    %407 = vmatpush1.msra.mxu0 0.0
    %408 = vmatprep.subr.mxu0 0.0
    %409 = vmatpush1.msra.mxu0 0.0
    %410 = vmatprep.subr.mxu0 0.0
    %411 = vmatpush1.msra.mxu0 0.0
    %412 = vmatprep.subr.mxu0 0.0
    %413 = vmatpush1.msra.mxu0 0.0
    %414 = vmatprep.subr.mxu0 0.0
    %415 = vmatpush1.msra.mxu0 0.0
    %416 = vmatprep.subr.mxu0 0.0
    %417 = vmatpush1.msra.mxu0 0.0
    %418 = vmatprep.subr.mxu0 0.0
    %419 = vmatpush1.msra.mxu0 0.0
    %420 = vmatprep.subr.mxu0 0.0
    %421 = vmatpush1.msra.mxu0 0.0
    %422 = vmatprep.subr.mxu0 0.0
    %423 = vmatpush1.msra.mxu0 0.0
    %424 = vmatprep.subr.mxu0 0.0
    %425 = vmatpush1.msra.mxu0 0.0
    %426 = vmatprep.mubr.f32.mxu0 0.0
    %427 = vmatmul.mubr.f32.gmra.mrb[0].mxu0 %v289
    %v428 = vpop.f32.mrb[0].mxu0
    %v429 = vadd.f32 0.0, %v428
    %v430 = vpop.f32.mrb[0].mxu0
    %431 = vdwg.mxu0
    %v432 = vadd.f32 %v358, %v170
    %v433 = vadd.f32 %v139, %v432
    %v434 = vxor.u32 %v433, 2147483648
    %v435 = vmul.f32 %v434, 1.442695
    %v436 = vpow.pop %v435
    %v437 = vadd.f32 %v436, 1.0
    %v438 = vrcp.pop %v437
    %v439 = vmul.f32 1.0, %v438
    %441 = vrot.lane.b32.xlu0 %v432, 64
    %v442 = vpop.permute.xlu0 %441
    %v444 = vmul.f32 %v439, %v442
    %446 = vrot.lane.b32.xlu0 %v444, 64
    %v447 = vpop.permute.xlu0 %446
    %v449 = vadd.f32 %v139, %v447
    %v450 = vtanh.pop %v449
    %v451 = vsub.f32 1.0, %v439
    %453 = vrot.lane.b32.xlu0 %v450, 96
    %v454 = vpop.permute.xlu0 %453
    %v456 = vmul.f32 %v451, %v454
    %v457 = vmul.f32 %v439, %v282
    %v458 = vadd.f32 %v456, %v457
    %v459 = vadd.f32 %v360, %v171
    %v460 = vadd.f32 %v429, %v172
    %v461 = vadd.f32 %v459, %v460
    %v462 = vxor.u32 %v461, 2147483648
    %v463 = vmul.f32 %v462, 1.442695
    %v464 = vpow.pop %v463
    %v465 = vadd.f32 %v464, 1.0
    %v466 = vrcp.pop %v465
    %v467 = vmul.f32 1.0, %v466
    %469 = vrot.lane.b32.xlu0 %v460, 64
    %v470 = vpop.permute.xlu0 %469
    %v472 = vmul.f32 %v467, %v470
    %474 = vrot.lane.b32.xlu0 %v472, 64
    %v475 = vpop.permute.xlu0 %474
    %v477 = vadd.f32 %v459, %v475
    %v478 = vtanh.pop %v477
    %v479 = vsub.f32 1.0, %v467
    %481 = vrot.lane.b32.xlu0 %v478, 96
    %v482 = vpop.permute.xlu0 %481
    %v484 = vmul.f32 %v479, %v482
    %v485 = vmul.f32 %v467, %v175
    %v486 = vadd.f32 %v484, %v485
    %488 = vrot.lane.b32.xlu0 %v458, 96
    %v489 = vpop.permute.xlu0 %488
    %v491 = vsel %vm56, %v489, %v486
    %v493 = vsel %vm178, %v491, 0
    %495 = vmatprep.subr.mxu0 %v147
    %496 = vmatpush1.msra.mxu0 %v146
    %497 = vmatprep.subr.mxu0 %v150
    %498 = vmatpush1.msra.mxu0 %v149
    %499 = vmatprep.subr.mxu0 %v153
    %500 = vmatpush1.msra.mxu0 %v152
    %501 = vmatprep.subr.mxu0 %v156
    %502 = vmatpush1.msra.mxu0 %v155
    %503 = vmatprep.subr.mxu0 %v159
    %504 = vmatpush1.msra.mxu0 %v158
    %505 = vmatprep.subr.mxu0 %v162
    %506 = vmatpush1.msra.mxu0 %v161
    %507 = vmatprep.subr.mxu0 %v165
    %508 = vmatpush1.msra.mxu0 %v164
    %509 = vmatprep.subr.mxu0 %v168
    %510 = vmatpush1.msra.mxu0 %v167
    %511 = vmatprep.subr.mxu0 0.0
    %512 = vmatpush1.msra.mxu0 0.0
    %513 = vmatprep.subr.mxu0 0.0
    %514 = vmatpush1.msra.mxu0 0.0
    %515 = vmatprep.subr.mxu0 0.0
    %516 = vmatpush1.msra.mxu0 0.0
    %517 = vmatprep.subr.mxu0 0.0
    %518 = vmatpush1.msra.mxu0 0.0
    %519 = vmatprep.subr.mxu0 0.0
    %520 = vmatpush1.msra.mxu0 0.0
    %521 = vmatprep.subr.mxu0 0.0
    %522 = vmatpush1.msra.mxu0 0.0
    %523 = vmatprep.subr.mxu0 0.0
    %524 = vmatpush1.msra.mxu0 0.0
    %525 = vmatprep.subr.mxu0 0.0
    %526 = vmatpush1.msra.mxu0 0.0
    %527 = vmatprep.subr.mxu0 0.0
    %528 = vmatpush1.msra.mxu0 0.0
    %529 = vmatprep.subr.mxu0 0.0
    %530 = vmatpush1.msra.mxu0 0.0
    %531 = vmatprep.subr.mxu0 0.0
    %532 = vmatpush1.msra.mxu0 0.0
    %533 = vmatprep.subr.mxu0 0.0
    %534 = vmatpush1.msra.mxu0 0.0
    %535 = vmatprep.subr.mxu0 0.0
    %536 = vmatpush1.msra.mxu0 0.0
    %537 = vmatprep.subr.mxu0 0.0
    %538 = vmatpush1.msra.mxu0 0.0
    %539 = vmatprep.subr.mxu0 0.0
    %540 = vmatpush1.msra.mxu0 0.0
    %541 = vmatprep.subr.mxu0 0.0
    %542 = vmatpush1.msra.mxu0 0.0
    %543 = vmatprep.subr.mxu0 0.0
    %544 = vmatpush1.msra.mxu0 0.0
    %545 = vmatprep.subr.mxu0 0.0
    %546 = vmatpush1.msra.mxu0 0.0
    %547 = vmatprep.subr.mxu0 0.0
    %548 = vmatpush1.msra.mxu0 0.0
    %549 = vmatprep.subr.mxu0 0.0
    %550 = vmatpush1.msra.mxu0 0.0
    %551 = vmatprep.subr.mxu0 0.0
    %552 = vmatpush1.msra.mxu0 0.0
    %553 = vmatprep.subr.mxu0 0.0
    %554 = vmatpush1.msra.mxu0 0.0
    %555 = vmatprep.subr.mxu0 0.0
    %556 = vmatpush1.msra.mxu0 0.0
    %557 = vmatprep.subr.mxu0 0.0
    %558 = vmatpush1.msra.mxu0 0.0
    %559 = vmatprep.mubr.f32.mxu0 0.0
    %560 = vmatmul.mubr.f32.gmra.mrb[0].mxu0 %v493
    %v561 = vpop.f32.mrb[0].mxu0
    %v562 = vadd.f32 0.0, %v561
    %v563 = vpop.f32.mrb[0].mxu0
    %v564 = vadd.f32 0.0, %v563
    %565 = vdwg.mxu0
    %566 = vmatprep.subr.mxu0 0.0
    %567 = vmatpush1.msra.mxu0 %v148
    %568 = vmatprep.subr.mxu0 0.0
    %569 = vmatpush1.msra.mxu0 %v151
    %570 = vmatprep.subr.mxu0 0.0
    %571 = vmatpush1.msra.mxu0 %v154
    %572 = vmatprep.subr.mxu0 0.0
    %573 = vmatpush1.msra.mxu0 %v157
    %574 = vmatprep.subr.mxu0 0.0
    %575 = vmatpush1.msra.mxu0 %v160
    %576 = vmatprep.subr.mxu0 0.0
    %577 = vmatpush1.msra.mxu0 %v163
    %578 = vmatprep.subr.mxu0 0.0
    %579 = vmatpush1.msra.mxu0 %v166
    %580 = vmatprep.subr.mxu0 0.0
    %581 = vmatpush1.msra.mxu0 %v169
    %582 = vmatprep.subr.mxu0 0.0
    %583 = vmatpush1.msra.mxu0 0.0
    %584 = vmatprep.subr.mxu0 0.0
    %585 = vmatpush1.msra.mxu0 0.0
    %586 = vmatprep.subr.mxu0 0.0
    %587 = vmatpush1.msra.mxu0 0.0
    %588 = vmatprep.subr.mxu0 0.0
    %589 = vmatpush1.msra.mxu0 0.0
    %590 = vmatprep.subr.mxu0 0.0
    %591 = vmatpush1.msra.mxu0 0.0
    %592 = vmatprep.subr.mxu0 0.0
    %593 = vmatpush1.msra.mxu0 0.0
    %594 = vmatprep.subr.mxu0 0.0
    %595 = vmatpush1.msra.mxu0 0.0
    %596 = vmatprep.subr.mxu0 0.0
    %597 = vmatpush1.msra.mxu0 0.0
    %598 = vmatprep.subr.mxu0 0.0
    %599 = vmatpush1.msra.mxu0 0.0
    %600 = vmatprep.subr.mxu0 0.0
    %601 = vmatpush1.msra.mxu0 0.0
    %602 = vmatprep.subr.mxu0 0.0
    %603 = vmatpush1.msra.mxu0 0.0
    %604 = vmatprep.subr.mxu0 0.0
    %605 = vmatpush1.msra.mxu0 0.0
    %606 = vmatprep.subr.mxu0 0.0
    %607 = vmatpush1.msra.mxu0 0.0
    %608 = vmatprep.subr.mxu0 0.0
    %609 = vmatpush1.msra.mxu0 0.0
    %610 = vmatprep.subr.mxu0 0.0
    %611 = vmatpush1.msra.mxu0 0.0
    %612 = vmatprep.subr.mxu0 0.0
    %613 = vmatpush1.msra.mxu0 0.0
    %614 = vmatprep.subr.mxu0 0.0
    %615 = vmatpush1.msra.mxu0 0.0
    %616 = vmatprep.subr.mxu0 0.0
    %617 = vmatpush1.msra.mxu0 0.0
    %618 = vmatprep.subr.mxu0 0.0
    %619 = vmatpush1.msra.mxu0 0.0
    %620 = vmatprep.subr.mxu0 0.0
    %621 = vmatpush1.msra.mxu0 0.0
    %622 = vmatprep.subr.mxu0 0.0
    %623 = vmatpush1.msra.mxu0 0.0
    %624 = vmatprep.subr.mxu0 0.0
    %625 = vmatpush1.msra.mxu0 0.0
    %626 = vmatprep.subr.mxu0 0.0
    %627 = vmatpush1.msra.mxu0 0.0
    %628 = vmatprep.subr.mxu0 0.0
    %629 = vmatpush1.msra.mxu0 0.0
    %630 = vmatprep.mubr.f32.mxu0 0.0
    %631 = vmatmul.mubr.f32.gmra.mrb[0].mxu0 %v493
    %v632 = vpop.f32.mrb[0].mxu0
    %v633 = vadd.f32 0.0, %v632
    %v634 = vpop.f32.mrb[0].mxu0
    %635 = vdwg.mxu0
    %v636 = vadd.f32 %v562, %v170
    %v637 = vadd.f32 %v140, %v636
    %v638 = vxor.u32 %v637, 2147483648
    %v639 = vmul.f32 %v638, 1.442695
    %v640 = vpow.pop %v639
    %v641 = vadd.f32 %v640, 1.0
    %v642 = vrcp.pop %v641
    %v643 = vmul.f32 1.0, %v642
    %645 = vrot.lane.b32.xlu0 %v636, 64
    %v646 = vpop.permute.xlu0 %645
    %v648 = vmul.f32 %v643, %v646
    %650 = vrot.lane.b32.xlu0 %v648, 64
    %v651 = vpop.permute.xlu0 %650
    %v653 = vadd.f32 %v140, %v651
    %v654 = vtanh.pop %v653
    %v655 = vsub.f32 1.0, %v643
    %657 = vrot.lane.b32.xlu0 %v654, 96
    %v658 = vpop.permute.xlu0 %657
    %v660 = vmul.f32 %v655, %v658
    %v661 = vmul.f32 %v643, %v458
    %v662 = vadd.f32 %v660, %v661
    %v663 = vadd.f32 %v564, %v171
    %v664 = vadd.f32 %v633, %v172
    %v665 = vadd.f32 %v663, %v664
    %v666 = vxor.u32 %v665, 2147483648
    %v667 = vmul.f32 %v666, 1.442695
    %v668 = vpow.pop %v667
    %v669 = vadd.f32 %v668, 1.0
    %v670 = vrcp.pop %v669
    %v671 = vmul.f32 1.0, %v670
    %673 = vrot.lane.b32.xlu0 %v664, 64
    %v674 = vpop.permute.xlu0 %673
    %v676 = vmul.f32 %v671, %v674
    %678 = vrot.lane.b32.xlu0 %v676, 64
    %v679 = vpop.permute.xlu0 %678
    %v681 = vadd.f32 %v663, %v679
    %v682 = vtanh.pop %v681
    %v683 = vsub.f32 1.0, %v671
    %685 = vrot.lane.b32.xlu0 %v682, 96
    %v686 = vpop.permute.xlu0 %685
    %v688 = vmul.f32 %v683, %v686
    %v689 = vmul.f32 %v671, %v486
    %v690 = vadd.f32 %v688, %v689
    %692 = vrot.lane.b32.xlu0 %v662, 96
    %v693 = vpop.permute.xlu0 %692
    %v695 = vsel %vm56, %v693, %v690
    %v697 = vsel %vm178, %v695, 0
    %699 = vmatprep.subr.mxu0 %v147
    %700 = vmatpush1.msra.mxu0 %v146
    %701 = vmatprep.subr.mxu0 %v150
    %702 = vmatpush1.msra.mxu0 %v149
    %703 = vmatprep.subr.mxu0 %v153
    %704 = vmatpush1.msra.mxu0 %v152
    %705 = vmatprep.subr.mxu0 %v156
    %706 = vmatpush1.msra.mxu0 %v155
    %707 = vmatprep.subr.mxu0 %v159
    %708 = vmatpush1.msra.mxu0 %v158
    %709 = vmatprep.subr.mxu0 %v162
    %710 = vmatpush1.msra.mxu0 %v161
    %711 = vmatprep.subr.mxu0 %v165
    %712 = vmatpush1.msra.mxu0 %v164
    %713 = vmatprep.subr.mxu0 %v168
    %714 = vmatpush1.msra.mxu0 %v167
    %715 = vmatprep.subr.mxu0 0.0
    %716 = vmatpush1.msra.mxu0 0.0
    %717 = vmatprep.subr.mxu0 0.0
    %718 = vmatpush1.msra.mxu0 0.0
    %719 = vmatprep.subr.mxu0 0.0
    %720 = vmatpush1.msra.mxu0 0.0
    %721 = vmatprep.subr.mxu0 0.0
    %722 = vmatpush1.msra.mxu0 0.0
    %723 = vmatprep.subr.mxu0 0.0
    %724 = vmatpush1.msra.mxu0 0.0
    %725 = vmatprep.subr.mxu0 0.0
    %726 = vmatpush1.msra.mxu0 0.0
    %727 = vmatprep.subr.mxu0 0.0
    %728 = vmatpush1.msra.mxu0 0.0
    %729 = vmatprep.subr.mxu0 0.0
    %730 = vmatpush1.msra.mxu0 0.0
    %731 = vmatprep.subr.mxu0 0.0
    %732 = vmatpush1.msra.mxu0 0.0
    %733 = vmatprep.subr.mxu0 0.0
    %734 = vmatpush1.msra.mxu0 0.0
    %735 = vmatprep.subr.mxu0 0.0
    %736 = vmatpush1.msra.mxu0 0.0
    %737 = vmatprep.subr.mxu0 0.0
    %738 = vmatpush1.msra.mxu0 0.0
    %739 = vmatprep.subr.mxu0 0.0
    %740 = vmatpush1.msra.mxu0 0.0
    %741 = vmatprep.subr.mxu0 0.0
    %742 = vmatpush1.msra.mxu0 0.0
    %743 = vmatprep.subr.mxu0 0.0
    %744 = vmatpush1.msra.mxu0 0.0
    %745 = vmatprep.subr.mxu0 0.0
    %746 = vmatpush1.msra.mxu0 0.0
    %747 = vmatprep.subr.mxu0 0.0
    %748 = vmatpush1.msra.mxu0 0.0
    %749 = vmatprep.subr.mxu0 0.0
    %750 = vmatpush1.msra.mxu0 0.0
    %751 = vmatprep.subr.mxu0 0.0
    %752 = vmatpush1.msra.mxu0 0.0
    %753 = vmatprep.subr.mxu0 0.0
    %754 = vmatpush1.msra.mxu0 0.0
    %755 = vmatprep.subr.mxu0 0.0
    %756 = vmatpush1.msra.mxu0 0.0
    %757 = vmatprep.subr.mxu0 0.0
    %758 = vmatpush1.msra.mxu0 0.0
    %759 = vmatprep.subr.mxu0 0.0
    %760 = vmatpush1.msra.mxu0 0.0
    %761 = vmatprep.subr.mxu0 0.0
    %762 = vmatpush1.msra.mxu0 0.0
    %763 = vmatprep.mubr.f32.mxu0 0.0
    %764 = vmatmul.mubr.f32.gmra.mrb[0].mxu0 %v697
    %v765 = vpop.f32.mrb[0].mxu0
    %v766 = vadd.f32 0.0, %v765
    %v767 = vpop.f32.mrb[0].mxu0
    %v768 = vadd.f32 0.0, %v767
    %769 = vdwg.mxu0
    %770 = vmatprep.subr.mxu0 0.0
    %771 = vmatpush1.msra.mxu0 %v148
    %772 = vmatprep.subr.mxu0 0.0
    %773 = vmatpush1.msra.mxu0 %v151
    %774 = vmatprep.subr.mxu0 0.0
    %775 = vmatpush1.msra.mxu0 %v154
    %776 = vmatprep.subr.mxu0 0.0
    %777 = vmatpush1.msra.mxu0 %v157
    %778 = vmatprep.subr.mxu0 0.0
    %779 = vmatpush1.msra.mxu0 %v160
    %780 = vmatprep.subr.mxu0 0.0
    %781 = vmatpush1.msra.mxu0 %v163
    %782 = vmatprep.subr.mxu0 0.0
    %783 = vmatpush1.msra.mxu0 %v166
    %784 = vmatprep.subr.mxu0 0.0
    %785 = vmatpush1.msra.mxu0 %v169
    %786 = vmatprep.subr.mxu0 0.0
    %787 = vmatpush1.msra.mxu0 0.0
    %788 = vmatprep.subr.mxu0 0.0
    %789 = vmatpush1.msra.mxu0 0.0
    %790 = vmatprep.subr.mxu0 0.0
    %791 = vmatpush1.msra.mxu0 0.0
    %792 = vmatprep.subr.mxu0 0.0
    %793 = vmatpush1.msra.mxu0 0.0
    %794 = vmatprep.subr.mxu0 0.0
    %795 = vmatpush1.msra.mxu0 0.0
    %796 = vmatprep.subr.mxu0 0.0
    %797 = vmatpush1.msra.mxu0 0.0
    %798 = vmatprep.subr.mxu0 0.0
    %799 = vmatpush1.msra.mxu0 0.0
    %800 = vmatprep.subr.mxu0 0.0
    %801 = vmatpush1.msra.mxu0 0.0
    %802 = vmatprep.subr.mxu0 0.0
    %803 = vmatpush1.msra.mxu0 0.0
    %804 = vmatprep.subr.mxu0 0.0
    %805 = vmatpush1.msra.mxu0 0.0
    %806 = vmatprep.subr.mxu0 0.0
    %807 = vmatpush1.msra.mxu0 0.0
    %808 = vmatprep.subr.mxu0 0.0
    %809 = vmatpush1.msra.mxu0 0.0
    %810 = vmatprep.subr.mxu0 0.0
    %811 = vmatpush1.msra.mxu0 0.0
    %812 = vmatprep.subr.mxu0 0.0
    %813 = vmatpush1.msra.mxu0 0.0
    %814 = vmatprep.subr.mxu0 0.0
    %815 = vmatpush1.msra.mxu0 0.0
    %816 = vmatprep.subr.mxu0 0.0
    %817 = vmatpush1.msra.mxu0 0.0
    %818 = vmatprep.subr.mxu0 0.0
    %819 = vmatpush1.msra.mxu0 0.0
    %820 = vmatprep.subr.mxu0 0.0
    %821 = vmatpush1.msra.mxu0 0.0
    %822 = vmatprep.subr.mxu0 0.0
    %823 = vmatpush1.msra.mxu0 0.0
    %824 = vmatprep.subr.mxu0 0.0
    %825 = vmatpush1.msra.mxu0 0.0
    %826 = vmatprep.subr.mxu0 0.0
    %827 = vmatpush1.msra.mxu0 0.0
    %828 = vmatprep.subr.mxu0 0.0
    %829 = vmatpush1.msra.mxu0 0.0
    %830 = vmatprep.subr.mxu0 0.0
    %831 = vmatpush1.msra.mxu0 0.0
    %832 = vmatprep.subr.mxu0 0.0
    %833 = vmatpush1.msra.mxu0 0.0
    %834 = vmatprep.mubr.f32.mxu0 0.0
    %835 = vmatmul.mubr.f32.gmra.mrb[0].mxu0 %v697
    %v836 = vpop.f32.mrb[0].mxu0
    %v837 = vadd.f32 0.0, %v836
    %v838 = vpop.f32.mrb[0].mxu0
    %839 = vdwg.mxu0
    %v840 = vadd.f32 %v766, %v170
    %v841 = vadd.f32 %v141, %v840
    %v842 = vxor.u32 %v841, 2147483648
    %v843 = vmul.f32 %v842, 1.442695
    %v844 = vpow.pop %v843
    %v845 = vadd.f32 %v844, 1.0
    %v846 = vrcp.pop %v845
    %v847 = vmul.f32 1.0, %v846
    %849 = vrot.lane.b32.xlu0 %v840, 64
    %v850 = vpop.permute.xlu0 %849
    %v852 = vmul.f32 %v847, %v850
    %854 = vrot.lane.b32.xlu0 %v852, 64
    %v855 = vpop.permute.xlu0 %854
    %v857 = vadd.f32 %v141, %v855
    %v858 = vtanh.pop %v857
    %v859 = vsub.f32 1.0, %v847
    %861 = vrot.lane.b32.xlu0 %v858, 96
    %v862 = vpop.permute.xlu0 %861
    %v864 = vmul.f32 %v859, %v862
    %v865 = vmul.f32 %v847, %v662
    %v866 = vadd.f32 %v864, %v865
    %v867 = vadd.f32 %v768, %v171
    %v868 = vadd.f32 %v837, %v172
    %v869 = vadd.f32 %v867, %v868
    %v870 = vxor.u32 %v869, 2147483648
    %v871 = vmul.f32 %v870, 1.442695
    %v872 = vpow.pop %v871
    %v873 = vadd.f32 %v872, 1.0
    %v874 = vrcp.pop %v873
    %v875 = vmul.f32 1.0, %v874
    %877 = vrot.lane.b32.xlu0 %v868, 64
    %v878 = vpop.permute.xlu0 %877
    %v880 = vmul.f32 %v875, %v878
    %882 = vrot.lane.b32.xlu0 %v880, 64
    %v883 = vpop.permute.xlu0 %882
    %v885 = vadd.f32 %v867, %v883
    %v886 = vtanh.pop %v885
    %v887 = vsub.f32 1.0, %v875
    %889 = vrot.lane.b32.xlu0 %v886, 96
    %v890 = vpop.permute.xlu0 %889
    %v892 = vmul.f32 %v887, %v890
    %v893 = vmul.f32 %v875, %v690
    %v894 = vadd.f32 %v892, %v893
    %896 = vrot.lane.b32.xlu0 %v866, 96
    %v897 = vpop.permute.xlu0 %896
    %v899 = vsel %vm56, %v897, %v894
    %v901 = vsel %vm178, %v899, 0
    %903 = vmatprep.subr.mxu0 %v147
    %904 = vmatpush1.msra.mxu0 %v146
    %905 = vmatprep.subr.mxu0 %v150
    %906 = vmatpush1.msra.mxu0 %v149
    %907 = vmatprep.subr.mxu0 %v153
    %908 = vmatpush1.msra.mxu0 %v152
    %909 = vmatprep.subr.mxu0 %v156
    %910 = vmatpush1.msra.mxu0 %v155
    %911 = vmatprep.subr.mxu0 %v159
    %912 = vmatpush1.msra.mxu0 %v158
    %913 = vmatprep.subr.mxu0 %v162
    %914 = vmatpush1.msra.mxu0 %v161
    %915 = vmatprep.subr.mxu0 %v165
    %916 = vmatpush1.msra.mxu0 %v164
    %917 = vmatprep.subr.mxu0 %v168
    %918 = vmatpush1.msra.mxu0 %v167
    %919 = vmatprep.subr.mxu0 0.0
    %920 = vmatpush1.msra.mxu0 0.0
    %921 = vmatprep.subr.mxu0 0.0
    %922 = vmatpush1.msra.mxu0 0.0
    %923 = vmatprep.subr.mxu0 0.0
    %924 = vmatpush1.msra.mxu0 0.0
    %925 = vmatprep.subr.mxu0 0.0
    %926 = vmatpush1.msra.mxu0 0.0
    %927 = vmatprep.subr.mxu0 0.0
    %928 = vmatpush1.msra.mxu0 0.0
    %929 = vmatprep.subr.mxu0 0.0
    %930 = vmatpush1.msra.mxu0 0.0
    %931 = vmatprep.subr.mxu0 0.0
    %932 = vmatpush1.msra.mxu0 0.0
    %933 = vmatprep.subr.mxu0 0.0
    %934 = vmatpush1.msra.mxu0 0.0
    %935 = vmatprep.subr.mxu0 0.0
    %936 = vmatpush1.msra.mxu0 0.0
    %937 = vmatprep.subr.mxu0 0.0
    %938 = vmatpush1.msra.mxu0 0.0
    %939 = vmatprep.subr.mxu0 0.0
    %940 = vmatpush1.msra.mxu0 0.0
    %941 = vmatprep.subr.mxu0 0.0
    %942 = vmatpush1.msra.mxu0 0.0
    %943 = vmatprep.subr.mxu0 0.0
    %944 = vmatpush1.msra.mxu0 0.0
    %945 = vmatprep.subr.mxu0 0.0
    %946 = vmatpush1.msra.mxu0 0.0
    %947 = vmatprep.subr.mxu0 0.0
    %948 = vmatpush1.msra.mxu0 0.0
    %949 = vmatprep.subr.mxu0 0.0
    %950 = vmatpush1.msra.mxu0 0.0
    %951 = vmatprep.subr.mxu0 0.0
    %952 = vmatpush1.msra.mxu0 0.0
    %953 = vmatprep.subr.mxu0 0.0
    %954 = vmatpush1.msra.mxu0 0.0
    %955 = vmatprep.subr.mxu0 0.0
    %956 = vmatpush1.msra.mxu0 0.0
    %957 = vmatprep.subr.mxu0 0.0
    %958 = vmatpush1.msra.mxu0 0.0
    %959 = vmatprep.subr.mxu0 0.0
    %960 = vmatpush1.msra.mxu0 0.0
    %961 = vmatprep.subr.mxu0 0.0
    %962 = vmatpush1.msra.mxu0 0.0
    %963 = vmatprep.subr.mxu0 0.0
    %964 = vmatpush1.msra.mxu0 0.0
    %965 = vmatprep.subr.mxu0 0.0
    %966 = vmatpush1.msra.mxu0 0.0
    %967 = vmatprep.mubr.f32.mxu0 0.0
    %968 = vmatmul.mubr.f32.gmra.mrb[0].mxu0 %v901
    %v969 = vpop.f32.mrb[0].mxu0
    %v970 = vadd.f32 0.0, %v969
    %v971 = vpop.f32.mrb[0].mxu0
    %v972 = vadd.f32 0.0, %v971
    %973 = vdwg.mxu0
    %974 = vmatprep.subr.mxu0 0.0
    %975 = vmatpush1.msra.mxu0 %v148
    %976 = vmatprep.subr.mxu0 0.0
    %977 = vmatpush1.msra.mxu0 %v151
    %978 = vmatprep.subr.mxu0 0.0
    %979 = vmatpush1.msra.mxu0 %v154
    %980 = vmatprep.subr.mxu0 0.0
    %981 = vmatpush1.msra.mxu0 %v157
    %982 = vmatprep.subr.mxu0 0.0
    %983 = vmatpush1.msra.mxu0 %v160
    %984 = vmatprep.subr.mxu0 0.0
    %985 = vmatpush1.msra.mxu0 %v163
    %986 = vmatprep.subr.mxu0 0.0
    %987 = vmatpush1.msra.mxu0 %v166
    %988 = vmatprep.subr.mxu0 0.0
    %989 = vmatpush1.msra.mxu0 %v169
    %990 = vmatprep.subr.mxu0 0.0
    %991 = vmatpush1.msra.mxu0 0.0
    %992 = vmatprep.subr.mxu0 0.0
    %993 = vmatpush1.msra.mxu0 0.0
    %994 = vmatprep.subr.mxu0 0.0
    %995 = vmatpush1.msra.mxu0 0.0
    %996 = vmatprep.subr.mxu0 0.0
    %997 = vmatpush1.msra.mxu0 0.0
    %998 = vmatprep.subr.mxu0 0.0
    %999 = vmatpush1.msra.mxu0 0.0
    %1000 = vmatprep.subr.mxu0 0.0
    %1001 = vmatpush1.msra.mxu0 0.0
    %1002 = vmatprep.subr.mxu0 0.0
    %1003 = vmatpush1.msra.mxu0 0.0
    %1004 = vmatprep.subr.mxu0 0.0
    %1005 = vmatpush1.msra.mxu0 0.0
    %1006 = vmatprep.subr.mxu0 0.0
    %1007 = vmatpush1.msra.mxu0 0.0
    %1008 = vmatprep.subr.mxu0 0.0
    %1009 = vmatpush1.msra.mxu0 0.0
    %1010 = vmatprep.subr.mxu0 0.0
    %1011 = vmatpush1.msra.mxu0 0.0
    %1012 = vmatprep.subr.mxu0 0.0
    %1013 = vmatpush1.msra.mxu0 0.0
    %1014 = vmatprep.subr.mxu0 0.0
    %1015 = vmatpush1.msra.mxu0 0.0
    %1016 = vmatprep.subr.mxu0 0.0
    %1017 = vmatpush1.msra.mxu0 0.0
    %1018 = vmatprep.subr.mxu0 0.0
    %1019 = vmatpush1.msra.mxu0 0.0
    %1020 = vmatprep.subr.mxu0 0.0
    %1021 = vmatpush1.msra.mxu0 0.0
    %1022 = vmatprep.subr.mxu0 0.0
    %1023 = vmatpush1.msra.mxu0 0.0
    %1024 = vmatprep.subr.mxu0 0.0
    %1025 = vmatpush1.msra.mxu0 0.0
    %1026 = vmatprep.subr.mxu0 0.0
    %1027 = vmatpush1.msra.mxu0 0.0
    %1028 = vmatprep.subr.mxu0 0.0
    %1029 = vmatpush1.msra.mxu0 0.0
    %1030 = vmatprep.subr.mxu0 0.0
    %1031 = vmatpush1.msra.mxu0 0.0
    %1032 = vmatprep.subr.mxu0 0.0
    %1033 = vmatpush1.msra.mxu0 0.0
    %1034 = vmatprep.subr.mxu0 0.0
    %1035 = vmatpush1.msra.mxu0 0.0
    %1036 = vmatprep.subr.mxu0 0.0
    %1037 = vmatpush1.msra.mxu0 0.0
    %1038 = vmatprep.mubr.f32.mxu0 0.0
    %1039 = vmatmul.mubr.f32.gmra.mrb[0].mxu0 %v901
    %v1040 = vpop.f32.mrb[0].mxu0
    %v1041 = vadd.f32 0.0, %v1040
    %v1042 = vpop.f32.mrb[0].mxu0
    %1043 = vdwg.mxu0
    %v1044 = vadd.f32 %v970, %v170
    %v1045 = vadd.f32 %v142, %v1044
    %v1046 = vxor.u32 %v1045, 2147483648
    %v1047 = vmul.f32 %v1046, 1.442695
    %v1048 = vpow.pop %v1047
    %v1049 = vadd.f32 %v1048, 1.0
    %v1050 = vrcp.pop %v1049
    %v1051 = vmul.f32 1.0, %v1050
    %1053 = vrot.lane.b32.xlu0 %v1044, 64
    %v1054 = vpop.permute.xlu0 %1053
    %v1056 = vmul.f32 %v1051, %v1054
    %1058 = vrot.lane.b32.xlu0 %v1056, 64
    %v1059 = vpop.permute.xlu0 %1058
    %v1061 = vadd.f32 %v142, %v1059
    %v1062 = vtanh.pop %v1061
    %v1063 = vsub.f32 1.0, %v1051
    %1065 = vrot.lane.b32.xlu0 %v1062, 96
    %v1066 = vpop.permute.xlu0 %1065
    %v1068 = vmul.f32 %v1063, %v1066
    %v1069 = vmul.f32 %v1051, %v866
    %v1070 = vadd.f32 %v1068, %v1069
    %v1071 = vadd.f32 %v972, %v171
    %v1072 = vadd.f32 %v1041, %v172
    %v1073 = vadd.f32 %v1071, %v1072
    %v1074 = vxor.u32 %v1073, 2147483648
    %v1075 = vmul.f32 %v1074, 1.442695
    %v1076 = vpow.pop %v1075
    %v1077 = vadd.f32 %v1076, 1.0
    %v1078 = vrcp.pop %v1077
    %v1079 = vmul.f32 1.0, %v1078
    %1081 = vrot.lane.b32.xlu0 %v1072, 64
    %v1082 = vpop.permute.xlu0 %1081
    %v1084 = vmul.f32 %v1079, %v1082
    %1086 = vrot.lane.b32.xlu0 %v1084, 64
    %v1087 = vpop.permute.xlu0 %1086
    %v1089 = vadd.f32 %v1071, %v1087
    %v1090 = vtanh.pop %v1089
    %v1091 = vsub.f32 1.0, %v1079
    %1093 = vrot.lane.b32.xlu0 %v1090, 96
    %v1094 = vpop.permute.xlu0 %1093
    %v1096 = vmul.f32 %v1091, %v1094
    %v1097 = vmul.f32 %v1079, %v894
    %v1098 = vadd.f32 %v1096, %v1097
    %1100 = vrot.lane.b32.xlu0 %v1070, 96
    %v1101 = vpop.permute.xlu0 %1100
    %v1103 = vsel %vm56, %v1101, %v1098
    %v1105 = vsel %vm178, %v1103, 0
    %1107 = vmatprep.subr.mxu0 %v147
    %1108 = vmatpush1.msra.mxu0 %v146
    %1109 = vmatprep.subr.mxu0 %v150
    %1110 = vmatpush1.msra.mxu0 %v149
    %1111 = vmatprep.subr.mxu0 %v153
    %1112 = vmatpush1.msra.mxu0 %v152
    %1113 = vmatprep.subr.mxu0 %v156
    %1114 = vmatpush1.msra.mxu0 %v155
    %1115 = vmatprep.subr.mxu0 %v159
    %1116 = vmatpush1.msra.mxu0 %v158
    %1117 = vmatprep.subr.mxu0 %v162
    %1118 = vmatpush1.msra.mxu0 %v161
    %1119 = vmatprep.subr.mxu0 %v165
    %1120 = vmatpush1.msra.mxu0 %v164
    %1121 = vmatprep.subr.mxu0 %v168
    %1122 = vmatpush1.msra.mxu0 %v167
    %1123 = vmatprep.subr.mxu0 0.0
    %1124 = vmatpush1.msra.mxu0 0.0
    %1125 = vmatprep.subr.mxu0 0.0
    %1126 = vmatpush1.msra.mxu0 0.0
    %1127 = vmatprep.subr.mxu0 0.0
    %1128 = vmatpush1.msra.mxu0 0.0
    %1129 = vmatprep.subr.mxu0 0.0
    %1130 = vmatpush1.msra.mxu0 0.0
    %1131 = vmatprep.subr.mxu0 0.0
    %1132 = vmatpush1.msra.mxu0 0.0
    %1133 = vmatprep.subr.mxu0 0.0
    %1134 = vmatpush1.msra.mxu0 0.0
    %1135 = vmatprep.subr.mxu0 0.0
    %1136 = vmatpush1.msra.mxu0 0.0
    %1137 = vmatprep.subr.mxu0 0.0
    %1138 = vmatpush1.msra.mxu0 0.0
    %1139 = vmatprep.subr.mxu0 0.0
    %1140 = vmatpush1.msra.mxu0 0.0
    %1141 = vmatprep.subr.mxu0 0.0
    %1142 = vmatpush1.msra.mxu0 0.0
    %1143 = vmatprep.subr.mxu0 0.0
    %1144 = vmatpush1.msra.mxu0 0.0
    %1145 = vmatprep.subr.mxu0 0.0
    %1146 = vmatpush1.msra.mxu0 0.0
    %1147 = vmatprep.subr.mxu0 0.0
    %1148 = vmatpush1.msra.mxu0 0.0
    %1149 = vmatprep.subr.mxu0 0.0
    %1150 = vmatpush1.msra.mxu0 0.0
    %1151 = vmatprep.subr.mxu0 0.0
    %1152 = vmatpush1.msra.mxu0 0.0
    %1153 = vmatprep.subr.mxu0 0.0
    %1154 = vmatpush1.msra.mxu0 0.0
    %1155 = vmatprep.subr.mxu0 0.0
    %1156 = vmatpush1.msra.mxu0 0.0
    %1157 = vmatprep.subr.mxu0 0.0
    %1158 = vmatpush1.msra.mxu0 0.0
    %1159 = vmatprep.subr.mxu0 0.0
    %1160 = vmatpush1.msra.mxu0 0.0
    %1161 = vmatprep.subr.mxu0 0.0
    %1162 = vmatpush1.msra.mxu0 0.0
    %1163 = vmatprep.subr.mxu0 0.0
    %1164 = vmatpush1.msra.mxu0 0.0
    %1165 = vmatprep.subr.mxu0 0.0
    %1166 = vmatpush1.msra.mxu0 0.0
    %1167 = vmatprep.subr.mxu0 0.0
    %1168 = vmatpush1.msra.mxu0 0.0
    %1169 = vmatprep.subr.mxu0 0.0
    %1170 = vmatpush1.msra.mxu0 0.0
    %1171 = vmatprep.mubr.f32.mxu0 0.0
    %1172 = vmatmul.mubr.f32.gmra.mrb[0].mxu0 %v1105
    %v1173 = vpop.f32.mrb[0].mxu0
    %v1174 = vadd.f32 0.0, %v1173
    %v1175 = vpop.f32.mrb[0].mxu0
    %v1176 = vadd.f32 0.0, %v1175
    %1177 = vdwg.mxu0
    %1178 = vmatprep.subr.mxu0 0.0
    %1179 = vmatpush1.msra.mxu0 %v148
    %1180 = vmatprep.subr.mxu0 0.0
    %1181 = vmatpush1.msra.mxu0 %v151
    %1182 = vmatprep.subr.mxu0 0.0
    %1183 = vmatpush1.msra.mxu0 %v154
    %1184 = vmatprep.subr.mxu0 0.0
    %1185 = vmatpush1.msra.mxu0 %v157
    %1186 = vmatprep.subr.mxu0 0.0
    %1187 = vmatpush1.msra.mxu0 %v160
    %1188 = vmatprep.subr.mxu0 0.0
    %1189 = vmatpush1.msra.mxu0 %v163
    %1190 = vmatprep.subr.mxu0 0.0
    %1191 = vmatpush1.msra.mxu0 %v166
    %1192 = vmatprep.subr.mxu0 0.0
    %1193 = vmatpush1.msra.mxu0 %v169
    %1194 = vmatprep.subr.mxu0 0.0
    %1195 = vmatpush1.msra.mxu0 0.0
    %1196 = vmatprep.subr.mxu0 0.0
    %1197 = vmatpush1.msra.mxu0 0.0
    %1198 = vmatprep.subr.mxu0 0.0
    %1199 = vmatpush1.msra.mxu0 0.0
    %1200 = vmatprep.subr.mxu0 0.0
    %1201 = vmatpush1.msra.mxu0 0.0
    %1202 = vmatprep.subr.mxu0 0.0
    %1203 = vmatpush1.msra.mxu0 0.0
    %1204 = vmatprep.subr.mxu0 0.0
    %1205 = vmatpush1.msra.mxu0 0.0
    %1206 = vmatprep.subr.mxu0 0.0
    %1207 = vmatpush1.msra.mxu0 0.0
    %1208 = vmatprep.subr.mxu0 0.0
    %1209 = vmatpush1.msra.mxu0 0.0
    %1210 = vmatprep.subr.mxu0 0.0
    %1211 = vmatpush1.msra.mxu0 0.0
    %1212 = vmatprep.subr.mxu0 0.0
    %1213 = vmatpush1.msra.mxu0 0.0
    %1214 = vmatprep.subr.mxu0 0.0
    %1215 = vmatpush1.msra.mxu0 0.0
    %1216 = vmatprep.subr.mxu0 0.0
    %1217 = vmatpush1.msra.mxu0 0.0
    %1218 = vmatprep.subr.mxu0 0.0
    %1219 = vmatpush1.msra.mxu0 0.0
    %1220 = vmatprep.subr.mxu0 0.0
    %1221 = vmatpush1.msra.mxu0 0.0
    %1222 = vmatprep.subr.mxu0 0.0
    %1223 = vmatpush1.msra.mxu0 0.0
    %1224 = vmatprep.subr.mxu0 0.0
    %1225 = vmatpush1.msra.mxu0 0.0
    %1226 = vmatprep.subr.mxu0 0.0
    %1227 = vmatpush1.msra.mxu0 0.0
    %1228 = vmatprep.subr.mxu0 0.0
    %1229 = vmatpush1.msra.mxu0 0.0
    %1230 = vmatprep.subr.mxu0 0.0
    %1231 = vmatpush1.msra.mxu0 0.0
    %1232 = vmatprep.subr.mxu0 0.0
    %1233 = vmatpush1.msra.mxu0 0.0
    %1234 = vmatprep.subr.mxu0 0.0
    %1235 = vmatpush1.msra.mxu0 0.0
    %1236 = vmatprep.subr.mxu0 0.0
    %1237 = vmatpush1.msra.mxu0 0.0
    %1238 = vmatprep.subr.mxu0 0.0
    %1239 = vmatpush1.msra.mxu0 0.0
    %1240 = vmatprep.subr.mxu0 0.0
    %1241 = vmatpush1.msra.mxu0 0.0
    %1242 = vmatprep.mubr.f32.mxu0 0.0
    %1243 = vmatmul.mubr.f32.gmra.mrb[0].mxu0 %v1105
    %v1244 = vpop.f32.mrb[0].mxu0
    %v1245 = vadd.f32 0.0, %v1244
    %v1246 = vpop.f32.mrb[0].mxu0
    %1247 = vdwg.mxu0
    %v1248 = vadd.f32 %v1174, %v170
    %v1249 = vadd.f32 %v143, %v1248
    %v1250 = vxor.u32 %v1249, 2147483648
    %v1251 = vmul.f32 %v1250, 1.442695
    %v1252 = vpow.pop %v1251
    %v1253 = vadd.f32 %v1252, 1.0
    %v1254 = vrcp.pop %v1253
    %v1255 = vmul.f32 1.0, %v1254
    %1257 = vrot.lane.b32.xlu0 %v1248, 64
    %v1258 = vpop.permute.xlu0 %1257
    %v1260 = vmul.f32 %v1255, %v1258
    %1262 = vrot.lane.b32.xlu0 %v1260, 64
    %v1263 = vpop.permute.xlu0 %1262
    %v1265 = vadd.f32 %v143, %v1263
    %v1266 = vtanh.pop %v1265
    %v1267 = vsub.f32 1.0, %v1255
    %1269 = vrot.lane.b32.xlu0 %v1266, 96
    %v1270 = vpop.permute.xlu0 %1269
    %v1272 = vmul.f32 %v1267, %v1270
    %v1273 = vmul.f32 %v1255, %v1070
    %v1274 = vadd.f32 %v1272, %v1273
    %v1275 = vadd.f32 %v1176, %v171
    %v1276 = vadd.f32 %v1245, %v172
    %v1277 = vadd.f32 %v1275, %v1276
    %v1278 = vxor.u32 %v1277, 2147483648
    %v1279 = vmul.f32 %v1278, 1.442695
    %v1280 = vpow.pop %v1279
    %v1281 = vadd.f32 %v1280, 1.0
    %v1282 = vrcp.pop %v1281
    %v1283 = vmul.f32 1.0, %v1282
    %1285 = vrot.lane.b32.xlu0 %v1276, 64
    %v1286 = vpop.permute.xlu0 %1285
    %v1288 = vmul.f32 %v1283, %v1286
    %1290 = vrot.lane.b32.xlu0 %v1288, 64
    %v1291 = vpop.permute.xlu0 %1290
    %v1293 = vadd.f32 %v1275, %v1291
    %v1294 = vtanh.pop %v1293
    %v1295 = vsub.f32 1.0, %v1283
    %1297 = vrot.lane.b32.xlu0 %v1294, 96
    %v1298 = vpop.permute.xlu0 %1297
    %v1300 = vmul.f32 %v1295, %v1298
    %v1301 = vmul.f32 %v1283, %v1098
    %v1302 = vadd.f32 %v1300, %v1301
    %1304 = vrot.lane.b32.xlu0 %v1274, 96
    %v1305 = vpop.permute.xlu0 %1304
    %v1307 = vsel %vm56, %v1305, %v1302
    %v1309 = vsel %vm178, %v1307, 0
    %1311 = vmatprep.subr.mxu0 %v147
    %1312 = vmatpush1.msra.mxu0 %v146
    %1313 = vmatprep.subr.mxu0 %v150
    %1314 = vmatpush1.msra.mxu0 %v149
    %1315 = vmatprep.subr.mxu0 %v153
    %1316 = vmatpush1.msra.mxu0 %v152
    %1317 = vmatprep.subr.mxu0 %v156
    %1318 = vmatpush1.msra.mxu0 %v155
    %1319 = vmatprep.subr.mxu0 %v159
    %1320 = vmatpush1.msra.mxu0 %v158
    %1321 = vmatprep.subr.mxu0 %v162
    %1322 = vmatpush1.msra.mxu0 %v161
    %1323 = vmatprep.subr.mxu0 %v165
    %1324 = vmatpush1.msra.mxu0 %v164
    %1325 = vmatprep.subr.mxu0 %v168
    %1326 = vmatpush1.msra.mxu0 %v167
    %1327 = vmatprep.subr.mxu0 0.0
    %1328 = vmatpush1.msra.mxu0 0.0
    %1329 = vmatprep.subr.mxu0 0.0
    %1330 = vmatpush1.msra.mxu0 0.0
    %1331 = vmatprep.subr.mxu0 0.0
    %1332 = vmatpush1.msra.mxu0 0.0
    %1333 = vmatprep.subr.mxu0 0.0
    %1334 = vmatpush1.msra.mxu0 0.0
    %1335 = vmatprep.subr.mxu0 0.0
    %1336 = vmatpush1.msra.mxu0 0.0
    %1337 = vmatprep.subr.mxu0 0.0
    %1338 = vmatpush1.msra.mxu0 0.0
    %1339 = vmatprep.subr.mxu0 0.0
    %1340 = vmatpush1.msra.mxu0 0.0
    %1341 = vmatprep.subr.mxu0 0.0
    %1342 = vmatpush1.msra.mxu0 0.0
    %1343 = vmatprep.subr.mxu0 0.0
    %1344 = vmatpush1.msra.mxu0 0.0
    %1345 = vmatprep.subr.mxu0 0.0
    %1346 = vmatpush1.msra.mxu0 0.0
    %1347 = vmatprep.subr.mxu0 0.0
    %1348 = vmatpush1.msra.mxu0 0.0
    %1349 = vmatprep.subr.mxu0 0.0
    %1350 = vmatpush1.msra.mxu0 0.0
    %1351 = vmatprep.subr.mxu0 0.0
    %1352 = vmatpush1.msra.mxu0 0.0
    %1353 = vmatprep.subr.mxu0 0.0
    %1354 = vmatpush1.msra.mxu0 0.0
    %1355 = vmatprep.subr.mxu0 0.0
    %1356 = vmatpush1.msra.mxu0 0.0
    %1357 = vmatprep.subr.mxu0 0.0
    %1358 = vmatpush1.msra.mxu0 0.0
    %1359 = vmatprep.subr.mxu0 0.0
    %1360 = vmatpush1.msra.mxu0 0.0
    %1361 = vmatprep.subr.mxu0 0.0
    %1362 = vmatpush1.msra.mxu0 0.0
    %1363 = vmatprep.subr.mxu0 0.0
    %1364 = vmatpush1.msra.mxu0 0.0
    %1365 = vmatprep.subr.mxu0 0.0
    %1366 = vmatpush1.msra.mxu0 0.0
    %1367 = vmatprep.subr.mxu0 0.0
    %1368 = vmatpush1.msra.mxu0 0.0
    %1369 = vmatprep.subr.mxu0 0.0
    %1370 = vmatpush1.msra.mxu0 0.0
    %1371 = vmatprep.subr.mxu0 0.0
    %1372 = vmatpush1.msra.mxu0 0.0
    %1373 = vmatprep.subr.mxu0 0.0
    %1374 = vmatpush1.msra.mxu0 0.0
    %1375 = vmatprep.mubr.f32.mxu0 0.0
    %1376 = vmatmul.mubr.f32.gmra.mrb[0].mxu0 %v1309
    %v1377 = vpop.f32.mrb[0].mxu0
    %v1378 = vadd.f32 0.0, %v1377
    %v1379 = vpop.f32.mrb[0].mxu0
    %v1380 = vadd.f32 0.0, %v1379
    %1381 = vdwg.mxu0
    %1382 = vmatprep.subr.mxu0 0.0
    %1383 = vmatpush1.msra.mxu0 %v148
    %1384 = vmatprep.subr.mxu0 0.0
    %1385 = vmatpush1.msra.mxu0 %v151
    %1386 = vmatprep.subr.mxu0 0.0
    %1387 = vmatpush1.msra.mxu0 %v154
    %1388 = vmatprep.subr.mxu0 0.0
    %1389 = vmatpush1.msra.mxu0 %v157
    %1390 = vmatprep.subr.mxu0 0.0
    %1391 = vmatpush1.msra.mxu0 %v160
    %1392 = vmatprep.subr.mxu0 0.0
    %1393 = vmatpush1.msra.mxu0 %v163
    %1394 = vmatprep.subr.mxu0 0.0
    %1395 = vmatpush1.msra.mxu0 %v166
    %1396 = vmatprep.subr.mxu0 0.0
    %1397 = vmatpush1.msra.mxu0 %v169
    %1398 = vmatprep.subr.mxu0 0.0
    %1399 = vmatpush1.msra.mxu0 0.0
    %1400 = vmatprep.subr.mxu0 0.0
    %1401 = vmatpush1.msra.mxu0 0.0
    %1402 = vmatprep.subr.mxu0 0.0
    %1403 = vmatpush1.msra.mxu0 0.0
    %1404 = vmatprep.subr.mxu0 0.0
    %1405 = vmatpush1.msra.mxu0 0.0
    %1406 = vmatprep.subr.mxu0 0.0
    %1407 = vmatpush1.msra.mxu0 0.0
    %1408 = vmatprep.subr.mxu0 0.0
    %1409 = vmatpush1.msra.mxu0 0.0
    %1410 = vmatprep.subr.mxu0 0.0
    %1411 = vmatpush1.msra.mxu0 0.0
    %1412 = vmatprep.subr.mxu0 0.0
    %1413 = vmatpush1.msra.mxu0 0.0
    %1414 = vmatprep.subr.mxu0 0.0
    %1415 = vmatpush1.msra.mxu0 0.0
    %1416 = vmatprep.subr.mxu0 0.0
    %1417 = vmatpush1.msra.mxu0 0.0
    %1418 = vmatprep.subr.mxu0 0.0
    %1419 = vmatpush1.msra.mxu0 0.0
    %1420 = vmatprep.subr.mxu0 0.0
    %1421 = vmatpush1.msra.mxu0 0.0
    %1422 = vmatprep.subr.mxu0 0.0
    %1423 = vmatpush1.msra.mxu0 0.0
    %1424 = vmatprep.subr.mxu0 0.0
    %1425 = vmatpush1.msra.mxu0 0.0
    %1426 = vmatprep.subr.mxu0 0.0
    %1427 = vmatpush1.msra.mxu0 0.0
    %1428 = vmatprep.subr.mxu0 0.0
    %1429 = vmatpush1.msra.mxu0 0.0
    %1430 = vmatprep.subr.mxu0 0.0
    %1431 = vmatpush1.msra.mxu0 0.0
    %1432 = vmatprep.subr.mxu0 0.0
    %1433 = vmatpush1.msra.mxu0 0.0
    %1434 = vmatprep.subr.mxu0 0.0
    %1435 = vmatpush1.msra.mxu0 0.0
    %1436 = vmatprep.subr.mxu0 0.0
    %1437 = vmatpush1.msra.mxu0 0.0
    %1438 = vmatprep.subr.mxu0 0.0
    %1439 = vmatpush1.msra.mxu0 0.0
    %1440 = vmatprep.subr.mxu0 0.0
    %1441 = vmatpush1.msra.mxu0 0.0
    %1442 = vmatprep.subr.mxu0 0.0
    %1443 = vmatpush1.msra.mxu0 0.0
    %1444 = vmatprep.subr.mxu0 0.0
    %1445 = vmatpush1.msra.mxu0 0.0
    %1446 = vmatprep.mubr.f32.mxu0 0.0
    %1447 = vmatmul.mubr.f32.gmra.mrb[0].mxu0 %v1309
    %v1448 = vpop.f32.mrb[0].mxu0
    %v1449 = vadd.f32 0.0, %v1448
    %v1450 = vpop.f32.mrb[0].mxu0
    %1451 = vdwg.mxu0
    %v1452 = vadd.f32 %v1378, %v170
    %v1453 = vadd.f32 %v144, %v1452
    %v1454 = vxor.u32 %v1453, 2147483648
    %v1455 = vmul.f32 %v1454, 1.442695
    %v1456 = vpow.pop %v1455
    %v1457 = vadd.f32 %v1456, 1.0
    %v1458 = vrcp.pop %v1457
    %v1459 = vmul.f32 1.0, %v1458
    %1461 = vrot.lane.b32.xlu0 %v1452, 64
    %v1462 = vpop.permute.xlu0 %1461
    %v1464 = vmul.f32 %v1459, %v1462
    %1466 = vrot.lane.b32.xlu0 %v1464, 64
    %v1467 = vpop.permute.xlu0 %1466
    %v1469 = vadd.f32 %v144, %v1467
    %v1470 = vtanh.pop %v1469
    %v1471 = vsub.f32 1.0, %v1459
    %1473 = vrot.lane.b32.xlu0 %v1470, 96
    %v1474 = vpop.permute.xlu0 %1473
    %v1476 = vmul.f32 %v1471, %v1474
    %v1477 = vmul.f32 %v1459, %v1274
    %v1478 = vadd.f32 %v1476, %v1477
    %v1479 = vadd.f32 %v1380, %v171
    %v1480 = vadd.f32 %v1449, %v172
    %v1481 = vadd.f32 %v1479, %v1480
    %v1482 = vxor.u32 %v1481, 2147483648
    %v1483 = vmul.f32 %v1482, 1.442695
    %v1484 = vpow.pop %v1483
    %v1485 = vadd.f32 %v1484, 1.0
    %v1486 = vrcp.pop %v1485
    %v1487 = vmul.f32 1.0, %v1486
    %1489 = vrot.lane.b32.xlu0 %v1480, 64
    %v1490 = vpop.permute.xlu0 %1489
    %v1492 = vmul.f32 %v1487, %v1490
    %1494 = vrot.lane.b32.xlu0 %v1492, 64
    %v1495 = vpop.permute.xlu0 %1494
    %v1497 = vadd.f32 %v1479, %v1495
    %v1498 = vtanh.pop %v1497
    %v1499 = vsub.f32 1.0, %v1487
    %1501 = vrot.lane.b32.xlu0 %v1498, 96
    %v1502 = vpop.permute.xlu0 %1501
    %v1504 = vmul.f32 %v1499, %v1502
    %v1505 = vmul.f32 %v1487, %v1302
    %v1506 = vadd.f32 %v1504, %v1505
    %1508 = vrot.lane.b32.xlu0 %v1478, 96
    %v1509 = vpop.permute.xlu0 %1508
    %v1511 = vsel %vm56, %v1509, %v1506
    %v1513 = vsel %vm178, %v1511, 0
    %1515 = vmatprep.subr.mxu0 %v147
    %1516 = vmatpush1.msra.mxu0 %v146
    %1517 = vmatprep.subr.mxu0 %v150
    %1518 = vmatpush1.msra.mxu0 %v149
    %1519 = vmatprep.subr.mxu0 %v153
    %1520 = vmatpush1.msra.mxu0 %v152
    %1521 = vmatprep.subr.mxu0 %v156
    %1522 = vmatpush1.msra.mxu0 %v155
    %1523 = vmatprep.subr.mxu0 %v159
    %1524 = vmatpush1.msra.mxu0 %v158
    %1525 = vmatprep.subr.mxu0 %v162
    %1526 = vmatpush1.msra.mxu0 %v161
    %1527 = vmatprep.subr.mxu0 %v165
    %1528 = vmatpush1.msra.mxu0 %v164
    %1529 = vmatprep.subr.mxu0 %v168
    %1530 = vmatpush1.msra.mxu0 %v167
    %1531 = vmatprep.subr.mxu0 0.0
    %1532 = vmatpush1.msra.mxu0 0.0
    %1533 = vmatprep.subr.mxu0 0.0
    %1534 = vmatpush1.msra.mxu0 0.0
    %1535 = vmatprep.subr.mxu0 0.0
    %1536 = vmatpush1.msra.mxu0 0.0
    %1537 = vmatprep.subr.mxu0 0.0
    %1538 = vmatpush1.msra.mxu0 0.0
    %1539 = vmatprep.subr.mxu0 0.0
    %1540 = vmatpush1.msra.mxu0 0.0
    %1541 = vmatprep.subr.mxu0 0.0
    %1542 = vmatpush1.msra.mxu0 0.0
    %1543 = vmatprep.subr.mxu0 0.0
    %1544 = vmatpush1.msra.mxu0 0.0
    %1545 = vmatprep.subr.mxu0 0.0
    %1546 = vmatpush1.msra.mxu0 0.0
    %1547 = vmatprep.subr.mxu0 0.0
    %1548 = vmatpush1.msra.mxu0 0.0
    %1549 = vmatprep.subr.mxu0 0.0
    %1550 = vmatpush1.msra.mxu0 0.0
    %1551 = vmatprep.subr.mxu0 0.0
    %1552 = vmatpush1.msra.mxu0 0.0
    %1553 = vmatprep.subr.mxu0 0.0
    %1554 = vmatpush1.msra.mxu0 0.0
    %1555 = vmatprep.subr.mxu0 0.0
    %1556 = vmatpush1.msra.mxu0 0.0
    %1557 = vmatprep.subr.mxu0 0.0
    %1558 = vmatpush1.msra.mxu0 0.0
    %1559 = vmatprep.subr.mxu0 0.0
    %1560 = vmatpush1.msra.mxu0 0.0
    %1561 = vmatprep.subr.mxu0 0.0
    %1562 = vmatpush1.msra.mxu0 0.0
    %1563 = vmatprep.subr.mxu0 0.0
    %1564 = vmatpush1.msra.mxu0 0.0
    %1565 = vmatprep.subr.mxu0 0.0
    %1566 = vmatpush1.msra.mxu0 0.0
    %1567 = vmatprep.subr.mxu0 0.0
    %1568 = vmatpush1.msra.mxu0 0.0
    %1569 = vmatprep.subr.mxu0 0.0
    %1570 = vmatpush1.msra.mxu0 0.0
    %1571 = vmatprep.subr.mxu0 0.0
    %1572 = vmatpush1.msra.mxu0 0.0
    %1573 = vmatprep.subr.mxu0 0.0
    %1574 = vmatpush1.msra.mxu0 0.0
    %1575 = vmatprep.subr.mxu0 0.0
    %1576 = vmatpush1.msra.mxu0 0.0
    %1577 = vmatprep.subr.mxu0 0.0
    %1578 = vmatpush1.msra.mxu0 0.0
    %1579 = vmatprep.mubr.f32.mxu0 0.0
    %1580 = vmatmul.mubr.f32.gmra.mrb[0].mxu0 %v1513
    %v1581 = vpop.f32.mrb[0].mxu0
    %v1582 = vadd.f32 0.0, %v1581
    %v1583 = vpop.f32.mrb[0].mxu0
    %v1584 = vadd.f32 0.0, %v1583
    %1585 = vdwg.mxu0
    %1586 = vmatprep.subr.mxu0 0.0
    %1587 = vmatpush1.msra.mxu0 %v148
    %1588 = vmatprep.subr.mxu0 0.0
    %1589 = vmatpush1.msra.mxu0 %v151
    %1590 = vmatprep.subr.mxu0 0.0
    %1591 = vmatpush1.msra.mxu0 %v154
    %1592 = vmatprep.subr.mxu0 0.0
    %1593 = vmatpush1.msra.mxu0 %v157
    %1594 = vmatprep.subr.mxu0 0.0
    %1595 = vmatpush1.msra.mxu0 %v160
    %1596 = vmatprep.subr.mxu0 0.0
    %1597 = vmatpush1.msra.mxu0 %v163
    %1598 = vmatprep.subr.mxu0 0.0
    %1599 = vmatpush1.msra.mxu0 %v166
    %1600 = vmatprep.subr.mxu0 0.0
    %1601 = vmatpush1.msra.mxu0 %v169
    %1602 = vmatprep.subr.mxu0 0.0
    %1603 = vmatpush1.msra.mxu0 0.0
    %1604 = vmatprep.subr.mxu0 0.0
    %1605 = vmatpush1.msra.mxu0 0.0
    %1606 = vmatprep.subr.mxu0 0.0
    %1607 = vmatpush1.msra.mxu0 0.0
    %1608 = vmatprep.subr.mxu0 0.0
    %1609 = vmatpush1.msra.mxu0 0.0
    %1610 = vmatprep.subr.mxu0 0.0
    %1611 = vmatpush1.msra.mxu0 0.0
    %1612 = vmatprep.subr.mxu0 0.0
    %1613 = vmatpush1.msra.mxu0 0.0
    %1614 = vmatprep.subr.mxu0 0.0
    %1615 = vmatpush1.msra.mxu0 0.0
    %1616 = vmatprep.subr.mxu0 0.0
    %1617 = vmatpush1.msra.mxu0 0.0
    %1618 = vmatprep.subr.mxu0 0.0
    %1619 = vmatpush1.msra.mxu0 0.0
    %1620 = vmatprep.subr.mxu0 0.0
    %1621 = vmatpush1.msra.mxu0 0.0
    %1622 = vmatprep.subr.mxu0 0.0
    %1623 = vmatpush1.msra.mxu0 0.0
    %1624 = vmatprep.subr.mxu0 0.0
    %1625 = vmatpush1.msra.mxu0 0.0
    %1626 = vmatprep.subr.mxu0 0.0
    %1627 = vmatpush1.msra.mxu0 0.0
    %1628 = vmatprep.subr.mxu0 0.0
    %1629 = vmatpush1.msra.mxu0 0.0
    %1630 = vmatprep.subr.mxu0 0.0
    %1631 = vmatpush1.msra.mxu0 0.0
    %1632 = vmatprep.subr.mxu0 0.0
    %1633 = vmatpush1.msra.mxu0 0.0
    %1634 = vmatprep.subr.mxu0 0.0
    %1635 = vmatpush1.msra.mxu0 0.0
    %1636 = vmatprep.subr.mxu0 0.0
    %1637 = vmatpush1.msra.mxu0 0.0
    %1638 = vmatprep.subr.mxu0 0.0
    %1639 = vmatpush1.msra.mxu0 0.0
    %1640 = vmatprep.subr.mxu0 0.0
    %1641 = vmatpush1.msra.mxu0 0.0
    %1642 = vmatprep.subr.mxu0 0.0
    %1643 = vmatpush1.msra.mxu0 0.0
    %1644 = vmatprep.subr.mxu0 0.0
    %1645 = vmatpush1.msra.mxu0 0.0
    %1646 = vmatprep.subr.mxu0 0.0
    %1647 = vmatpush1.msra.mxu0 0.0
    %1648 = vmatprep.subr.mxu0 0.0
    %1649 = vmatpush1.msra.mxu0 0.0
    %1650 = vmatprep.mubr.f32.mxu0 0.0
    %1651 = vmatmul.mubr.f32.gmra.mrb[0].mxu0 %v1513
    %v1652 = vpop.f32.mrb[0].mxu0
    %v1653 = vadd.f32 0.0, %v1652
    %v1654 = vpop.f32.mrb[0].mxu0
    %1655 = vdwg.mxu0
    %v1656 = vadd.f32 %v1582, %v170
    %v1657 = vadd.f32 %v145, %v1656
    %v1658 = vxor.u32 %v1657, 2147483648
    %v1659 = vmul.f32 %v1658, 1.442695
    %v1660 = vpow.pop %v1659
    %v1661 = vadd.f32 %v1660, 1.0
    %v1662 = vrcp.pop %v1661
    %v1663 = vmul.f32 1.0, %v1662
    %1665 = vrot.lane.b32.xlu0 %v1656, 64
    %v1666 = vpop.permute.xlu0 %1665
    %v1668 = vmul.f32 %v1663, %v1666
    %1670 = vrot.lane.b32.xlu0 %v1668, 64
    %v1671 = vpop.permute.xlu0 %1670
    %v1673 = vadd.f32 %v145, %v1671
    %v1674 = vtanh.pop %v1673
    %v1675 = vsub.f32 1.0, %v1663
    %1677 = vrot.lane.b32.xlu0 %v1674, 96
    %v1678 = vpop.permute.xlu0 %1677
    %v1680 = vmul.f32 %v1675, %v1678
    %v1681 = vmul.f32 %v1663, %v1478
    %v1682 = vadd.f32 %v1680, %v1681
    %v1683 = vadd.f32 %v1584, %v171
    %v1684 = vadd.f32 %v1653, %v172
    %v1685 = vadd.f32 %v1683, %v1684
    %v1686 = vxor.u32 %v1685, 2147483648
    %v1687 = vmul.f32 %v1686, 1.442695
    %v1688 = vpow.pop %v1687
    %v1689 = vadd.f32 %v1688, 1.0
    %v1690 = vrcp.pop %v1689
    %v1691 = vmul.f32 1.0, %v1690
    %1693 = vrot.lane.b32.xlu0 %v1684, 64
    %v1694 = vpop.permute.xlu0 %1693
    %v1696 = vmul.f32 %v1691, %v1694
    %1698 = vrot.lane.b32.xlu0 %v1696, 64
    %v1699 = vpop.permute.xlu0 %1698
    %v1701 = vadd.f32 %v1683, %v1699
    %v1702 = vtanh.pop %v1701
    %v1703 = vsub.f32 1.0, %v1691
    %1705 = vrot.lane.b32.xlu0 %v1702, 96
    %v1706 = vpop.permute.xlu0 %1705
    %v1708 = vmul.f32 %v1703, %v1706
    %v1709 = vmul.f32 %v1691, %v1506
    %v1710 = vadd.f32 %v1708, %v1709
    %1712 = vrot.lane.b32.xlu0 %v1682, 96
    %v1713 = vpop.permute.xlu0 %1712
    %v1715 = vsel %vm56, %v1713, %v1710
    %v1717 = vsel %vm178, %v1715, 0
    %1719 = vmatprep.subr.mxu0 %v147
    %1720 = vmatpush1.msra.mxu0 %v146
    %1721 = vmatprep.subr.mxu0 %v150
    %1722 = vmatpush1.msra.mxu0 %v149
    %1723 = vmatprep.subr.mxu0 %v153
    %1724 = vmatpush1.msra.mxu0 %v152
    %1725 = vmatprep.subr.mxu0 %v156
    %1726 = vmatpush1.msra.mxu0 %v155
    %1727 = vmatprep.subr.mxu0 %v159
    %1728 = vmatpush1.msra.mxu0 %v158
    %1729 = vmatprep.subr.mxu0 %v162
    %1730 = vmatpush1.msra.mxu0 %v161
    %1731 = vmatprep.subr.mxu0 %v165
    %1732 = vmatpush1.msra.mxu0 %v164
    %1733 = vmatprep.subr.mxu0 %v168
    %1734 = vmatpush1.msra.mxu0 %v167
    %1735 = vmatprep.subr.mxu0 0.0
    %1736 = vmatpush1.msra.mxu0 0.0
    %1737 = vmatprep.subr.mxu0 0.0
    %1738 = vmatpush1.msra.mxu0 0.0
    %1739 = vmatprep.subr.mxu0 0.0
    %1740 = vmatpush1.msra.mxu0 0.0
    %1741 = vmatprep.subr.mxu0 0.0
    %1742 = vmatpush1.msra.mxu0 0.0
    %1743 = vmatprep.subr.mxu0 0.0
    %1744 = vmatpush1.msra.mxu0 0.0
    %1745 = vmatprep.subr.mxu0 0.0
    %1746 = vmatpush1.msra.mxu0 0.0
    %1747 = vmatprep.subr.mxu0 0.0
    %1748 = vmatpush1.msra.mxu0 0.0
    %1749 = vmatprep.subr.mxu0 0.0
    %1750 = vmatpush1.msra.mxu0 0.0
    %1751 = vmatprep.subr.mxu0 0.0
    %1752 = vmatpush1.msra.mxu0 0.0
    %1753 = vmatprep.subr.mxu0 0.0
    %1754 = vmatpush1.msra.mxu0 0.0
    %1755 = vmatprep.subr.mxu0 0.0
    %1756 = vmatpush1.msra.mxu0 0.0
    %1757 = vmatprep.subr.mxu0 0.0
    %1758 = vmatpush1.msra.mxu0 0.0
    %1759 = vmatprep.subr.mxu0 0.0
    %1760 = vmatpush1.msra.mxu0 0.0
    %1761 = vmatprep.subr.mxu0 0.0
    %1762 = vmatpush1.msra.mxu0 0.0
    %1763 = vmatprep.subr.mxu0 0.0
    %1764 = vmatpush1.msra.mxu0 0.0
    %1765 = vmatprep.subr.mxu0 0.0
    %1766 = vmatpush1.msra.mxu0 0.0
    %1767 = vmatprep.subr.mxu0 0.0
    %1768 = vmatpush1.msra.mxu0 0.0
    %1769 = vmatprep.subr.mxu0 0.0
    %1770 = vmatpush1.msra.mxu0 0.0
    %1771 = vmatprep.subr.mxu0 0.0
    %1772 = vmatpush1.msra.mxu0 0.0
    %1773 = vmatprep.subr.mxu0 0.0
    %1774 = vmatpush1.msra.mxu0 0.0
    %1775 = vmatprep.subr.mxu0 0.0
    %1776 = vmatpush1.msra.mxu0 0.0
    %1777 = vmatprep.subr.mxu0 0.0
    %1778 = vmatpush1.msra.mxu0 0.0
    %1779 = vmatprep.subr.mxu0 0.0
    %1780 = vmatpush1.msra.mxu0 0.0
    %1781 = vmatprep.subr.mxu0 0.0
    %1782 = vmatpush1.msra.mxu0 0.0
    %1783 = vmatprep.mubr.f32.mxu0 0.0
    %1784 = vmatmul.mubr.f32.gmra.mrb[0].mxu0 %v1717
    %v1785 = vpop.f32.mrb[0].mxu0
    %v1786 = vpop.f32.mrb[0].mxu0
    %v1787 = vadd.f32 0.0, %v1786
    %1788 = vdwg.mxu0
    %1789 = vmatprep.subr.mxu0 0.0
    %1790 = vmatpush1.msra.mxu0 %v148
    %1791 = vmatprep.subr.mxu0 0.0
    %1792 = vmatpush1.msra.mxu0 %v151
    %1793 = vmatprep.subr.mxu0 0.0
    %1794 = vmatpush1.msra.mxu0 %v154
    %1795 = vmatprep.subr.mxu0 0.0
    %1796 = vmatpush1.msra.mxu0 %v157
    %1797 = vmatprep.subr.mxu0 0.0
    %1798 = vmatpush1.msra.mxu0 %v160
    %1799 = vmatprep.subr.mxu0 0.0
    %1800 = vmatpush1.msra.mxu0 %v163
    %1801 = vmatprep.subr.mxu0 0.0
    %1802 = vmatpush1.msra.mxu0 %v166
    %1803 = vmatprep.subr.mxu0 0.0
    %1804 = vmatpush1.msra.mxu0 %v169
    %1805 = vmatprep.subr.mxu0 0.0
    %1806 = vmatpush1.msra.mxu0 0.0
    %1807 = vmatprep.subr.mxu0 0.0
    %1808 = vmatpush1.msra.mxu0 0.0
    %1809 = vmatprep.subr.mxu0 0.0
    %1810 = vmatpush1.msra.mxu0 0.0
    %1811 = vmatprep.subr.mxu0 0.0
    %1812 = vmatpush1.msra.mxu0 0.0
    %1813 = vmatprep.subr.mxu0 0.0
    %1814 = vmatpush1.msra.mxu0 0.0
    %1815 = vmatprep.subr.mxu0 0.0
    %1816 = vmatpush1.msra.mxu0 0.0
    %1817 = vmatprep.subr.mxu0 0.0
    %1818 = vmatpush1.msra.mxu0 0.0
    %1819 = vmatprep.subr.mxu0 0.0
    %1820 = vmatpush1.msra.mxu0 0.0
    %1821 = vmatprep.subr.mxu0 0.0
    %1822 = vmatpush1.msra.mxu0 0.0
    %1823 = vmatprep.subr.mxu0 0.0
    %1824 = vmatpush1.msra.mxu0 0.0
    %1825 = vmatprep.subr.mxu0 0.0
    %1826 = vmatpush1.msra.mxu0 0.0
    %1827 = vmatprep.subr.mxu0 0.0
    %1828 = vmatpush1.msra.mxu0 0.0
    %1829 = vmatprep.subr.mxu0 0.0
    %1830 = vmatpush1.msra.mxu0 0.0
    %1831 = vmatprep.subr.mxu0 0.0
    %1832 = vmatpush1.msra.mxu0 0.0
    %1833 = vmatprep.subr.mxu0 0.0
    %1834 = vmatpush1.msra.mxu0 0.0
    %1835 = vmatprep.subr.mxu0 0.0
    %1836 = vmatpush1.msra.mxu0 0.0
    %1837 = vmatprep.subr.mxu0 0.0
    %1838 = vmatpush1.msra.mxu0 0.0
    %1839 = vmatprep.subr.mxu0 0.0
    %1840 = vmatpush1.msra.mxu0 0.0
    %1841 = vmatprep.subr.mxu0 0.0
    %1842 = vmatpush1.msra.mxu0 0.0
    %1843 = vmatprep.subr.mxu0 0.0
    %1844 = vmatpush1.msra.mxu0 0.0
    %1845 = vmatprep.subr.mxu0 0.0
    %1846 = vmatpush1.msra.mxu0 0.0
    %1847 = vmatprep.subr.mxu0 0.0
    %1848 = vmatpush1.msra.mxu0 0.0
    %1849 = vmatprep.subr.mxu0 0.0
    %1850 = vmatpush1.msra.mxu0 0.0
    %1851 = vmatprep.subr.mxu0 0.0
    %1852 = vmatpush1.msra.mxu0 0.0
    %1853 = vmatprep.mubr.f32.mxu0 0.0
    %1854 = vmatmul.mubr.f32.gmra.mrb[0].mxu0 %v1717
    %v1855 = vpop.f32.mrb[0].mxu0
    %v1856 = vadd.f32 0.0, %v1855
    %v1857 = vpop.f32.mrb[0].mxu0
    %1858 = vdwg.mxu0
    %v1859 = vadd.f32 %v1787, %v171
    %v1860 = vadd.f32 %v1856, %v172
    %v1861 = vadd.f32 %v1859, %v1860
    %v1862 = vxor.u32 %v1861, 2147483648
    %v1863 = vmul.f32 %v1862, 1.442695
    %v1864 = vpow.pop %v1863
    %v1865 = vadd.f32 %v1864, 1.0
    %v1866 = vrcp.pop %v1865
    %v1867 = vmul.f32 1.0, %v1866
    %1869 = vrot.lane.b32.xlu0 %v1860, 64
    %v1870 = vpop.permute.xlu0 %1869
    %v1872 = vmul.f32 %v1867, %v1870
    %1874 = vrot.lane.b32.xlu0 %v1872, 64
    %v1875 = vpop.permute.xlu0 %1874
    %v1877 = vadd.f32 %v1859, %v1875
    %v1878 = vtanh.pop %v1877
    %v1879 = vsub.f32 1.0, %v1867
    %1881 = vrot.lane.b32.xlu0 %v1878, 96
    %v1882 = vpop.permute.xlu0 %1881
    %v1884 = vmul.f32 %v1879, %v1882
    %v1885 = vmul.f32 %v1867, %v1710
    %v1886 = vadd.f32 %v1884, %v1885
    %1887 = vst.msk [vmem:[%s6] sm:$0xff] %vm56, %v1713
    %1889 = vrot.lane.b32.xlu0 %v1886, 96
    %v1890 = vpop.permute.xlu0 %1889
    %s1892 = scalar_lea.vmem %s6, 8
    %1893 = vst.msk [vmem:[%s1892] sm:$0xff] %vm56, %v1890
    %1895 = vrot.lane.b32.xlu0 %v486, 96
    %v1896 = vpop.permute.xlu0 %1895
    %1899 = vrot.lane.b32.xlu0 %v894, 32
    %v1900 = vpop.permute.xlu0 %1899
    %1903 = vrot.lane.b32.xlu0 %v1098, 64
    %v1904 = vpop.permute.xlu0 %1903
    %1907 = vrot.lane.b32.xlu0 %v1302, 96
    %v1908 = vpop.permute.xlu0 %1907
    %1911 = vrot.lane.b32.xlu0 %v1710, 32
    %v1912 = vpop.permute.xlu0 %1911
    %1914 = vrot.lane.b32.xlu0 %v1886, 64
    %v1915 = vpop.permute.xlu0 %1914
    %v1917 = vsel %vm56, %v1896, %v690
    %v1918 = vsel %vm178, %v1917, %v1900
    %vm1919 = vcmask 785408
    %v1920 = vsel %vm1919, %v1918, %v1904
    %v1921 = vsel %vm56, %v1908, %v1506
    %v1922 = vsel %vm178, %v1921, %v1912
    %v1923 = vsel %vm1919, %v1922, %v1915
    %v1924 = vld [vmem:[%s4] sm:$0xff]
    %v1925 = vld [vmem:[%s4 + $0x8] sm:$0xff]
    %v1926 = vld [vmem:[%s4 + $0x10] sm:$0xff]
    %v1927 = vld [vmem:[%s4 + $0x18] sm:$0xff]
    %v1928 = vld [vmem:[%s4 + $0x20] sm:$0xff]
    %v1929 = vld [vmem:[%s4 + $0x28] sm:$0xff]
    %v1930 = vld [vmem:[%s4 + $0x30] sm:$0xff]
    %v1931 = vld [vmem:[%s4 + $0x38] sm:$0xff]
    %v1932 = vld [vmem:[%s4 + $0x40] sm:$0xff]
    %v1933 = vld [vmem:[%s4 + $0x48] sm:$0xff]
    %v1934 = vld [vmem:[%s4 + $0x50] sm:$0xff]
    %v1935 = vld [vmem:[%s4 + $0x58] sm:$0xff]
    %v1936 = vld [vmem:[%s4 + $0x60] sm:$0xff]
    %v1937 = vld [vmem:[%s4 + $0x68] sm:$0xff]
    %v1938 = vld [vmem:[%s4 + $0x70] sm:$0xff]
    %v1939 = vld [vmem:[%s4 + $0x78] sm:$0xff]
    %v1940 = vld [vmem:[%s4 + $0x80] sm:$0xff]
    %v1941 = vld [vmem:[%s4 + $0x88] sm:$0xff]
    %v1942 = vld [vmem:[%s4 + $0x90] sm:$0xff]
    %v1943 = vld [vmem:[%s4 + $0x98] sm:$0xff]
    %v1944 = vld [vmem:[%s4 + $0xa0] sm:$0xff]
    %v1945 = vld [vmem:[%s4 + $0xa8] sm:$0xff]
    %v1946 = vld [vmem:[%s4 + $0xb0] sm:$0xff]
    %v1947 = vld [vmem:[%s4 + $0xb8] sm:$0xff]
    %v1948 = vld [vmem:[%s4 + $0xc0] sm:$0xff]
    %v1949 = vld [vmem:[%s4 + $0xc8] sm:$0xff]
    %v1950 = vld [vmem:[%s4 + $0xd0] sm:$0xff]
    %v1951 = vld [vmem:[%s4 + $0xd8] sm:$0xff]
    %v1952 = vld [vmem:[%s4 + $0xe0] sm:$0xff]
    %v1953 = vld [vmem:[%s4 + $0xe8] sm:$0xff]
    %v1954 = vld [vmem:[%s4 + $0xf0] sm:$0xff]
    %v1955 = vld [vmem:[%s4 + $0xf8] sm:$0xff]
    %v1956 = vld [vmem:[%s4 + $0x100] sm:$0xff]
    %v1957 = vld [vmem:[%s4 + $0x108] sm:$0xff]
    %v1958 = vld [vmem:[%s4 + $0x110] sm:$0xff]
    %v1959 = vld [vmem:[%s4 + $0x118] sm:$0xff]
    %v1960 = vld [vmem:[%s4 + $0x120] sm:$0xff]
    %v1961 = vld [vmem:[%s4 + $0x128] sm:$0xff]
    %v1962 = vld [vmem:[%s4 + $0x130] sm:$0xff]
    %v1963 = vld [vmem:[%s4 + $0x138] sm:$0xff]
    %v1964 = vld [vmem:[%s4 + $0x140] sm:$0xff]
    %v1965 = vld [vmem:[%s4 + $0x148] sm:$0xff]
    %v1966 = vld [vmem:[%s4 + $0x150] sm:$0xff]
    %v1967 = vld [vmem:[%s4 + $0x158] sm:$0xff]
    %v1968 = vld [vmem:[%s4 + $0x160] sm:$0xff]
    %v1969 = vld [vmem:[%s4 + $0x168] sm:$0xff]
    %v1970 = vld [vmem:[%s4 + $0x170] sm:$0xff]
    %v1971 = vld [vmem:[%s4 + $0x178] sm:$0xff]
    %v1972 = vld [vmem:[%s4 + $0x180] sm:$0xff]
    %v1973 = vld [vmem:[%s4 + $0x188] sm:$0xff]
    %v1974 = vld [vmem:[%s4 + $0x190] sm:$0xff]
    %v1975 = vld [vmem:[%s4 + $0x198] sm:$0xff]
    %v1976 = vld [vmem:[%s4 + $0x1a0] sm:$0xff]
    %v1977 = vld [vmem:[%s4 + $0x1a8] sm:$0xff]
    %v1978 = vld [vmem:[%s4 + $0x1b0] sm:$0xff]
    %v1979 = vld [vmem:[%s4 + $0x1b8] sm:$0xff]
    %v1980 = vld [vmem:[%s4 + $0x1c0] sm:$0xff]
    %v1981 = vld [vmem:[%s4 + $0x1c8] sm:$0xff]
    %v1982 = vld [vmem:[%s4 + $0x1d0] sm:$0xff]
    %v1983 = vld [vmem:[%s4 + $0x1d8] sm:$0xff]
    %v1984 = vld [vmem:[%s4 + $0x1e0] sm:$0xff]
    %v1985 = vld [vmem:[%s4 + $0x1e8] sm:$0xff]
    %v1986 = vld [vmem:[%s4 + $0x1f0] sm:$0xff]
    %v1987 = vld [vmem:[%s4 + $0x1f8] sm:$0xff]
    %s1988 = scalar_lea.vmem %s4, 512
    %v1989 = vld [vmem:[%s1988] ss:$8 sm:$0x3]
    %v1991 = vlaneseq
    %v1992 = vshrl.u32 %v1991, 7
    %v1993 = vsub.s32 0, %v1992
    %v1994 = vrot.slane %v1989, %v1993
    %v1995 = vlaneseq
    %v1996 = vshrl.u32 %v1995, 7
    %v1997 = vsub.s32 1, %v1996
    %v1998 = vrot.slane %v1989, %v1997
    %2001 = vmatprep.subr.mxu0 %v1925
    %2002 = vmatpush1.msra.mxu0 %v1924
    %2003 = vmatprep.subr.mxu0 %v1927
    %2004 = vmatpush1.msra.mxu0 %v1926
    %2005 = vmatprep.subr.mxu0 %v1929
    %2006 = vmatpush1.msra.mxu0 %v1928
    %2007 = vmatprep.subr.mxu0 %v1931
    %2008 = vmatpush1.msra.mxu0 %v1930
    %2009 = vmatprep.subr.mxu0 %v1933
    %2010 = vmatpush1.msra.mxu0 %v1932
    %2011 = vmatprep.subr.mxu0 %v1935
    %2012 = vmatpush1.msra.mxu0 %v1934
    %2013 = vmatprep.subr.mxu0 %v1937
    %2014 = vmatpush1.msra.mxu0 %v1936
    %2015 = vmatprep.subr.mxu0 %v1939
    %2016 = vmatpush1.msra.mxu0 %v1938
    %2017 = vmatprep.subr.mxu0 %v1941
    %2018 = vmatpush1.msra.mxu0 %v1940
    %2019 = vmatprep.subr.mxu0 %v1943
    %2020 = vmatpush1.msra.mxu0 %v1942
    %2021 = vmatprep.subr.mxu0 %v1945
    %2022 = vmatpush1.msra.mxu0 %v1944
    %2023 = vmatprep.subr.mxu0 %v1947
    %2024 = vmatpush1.msra.mxu0 %v1946
    %2025 = vmatprep.subr.mxu0 %v1949
    %2026 = vmatpush1.msra.mxu0 %v1948
    %2027 = vmatprep.subr.mxu0 %v1951
    %2028 = vmatpush1.msra.mxu0 %v1950
    %2029 = vmatprep.subr.mxu0 %v1953
    %2030 = vmatpush1.msra.mxu0 %v1952
    %2031 = vmatprep.subr.mxu0 %v1955
    %2032 = vmatpush1.msra.mxu0 %v1954
    %2033 = vmatprep.subr.mxu0 %v1957
    %2034 = vmatpush1.msra.mxu0 %v1956
    %2035 = vmatprep.subr.mxu0 %v1959
    %2036 = vmatpush1.msra.mxu0 %v1958
    %2037 = vmatprep.subr.mxu0 %v1961
    %2038 = vmatpush1.msra.mxu0 %v1960
    %2039 = vmatprep.subr.mxu0 %v1963
    %2040 = vmatpush1.msra.mxu0 %v1962
    %2041 = vmatprep.subr.mxu0 %v1965
    %2042 = vmatpush1.msra.mxu0 %v1964
    %2043 = vmatprep.subr.mxu0 %v1967
    %2044 = vmatpush1.msra.mxu0 %v1966
    %2045 = vmatprep.subr.mxu0 %v1969
    %2046 = vmatpush1.msra.mxu0 %v1968
    %2047 = vmatprep.subr.mxu0 %v1971
    %2048 = vmatpush1.msra.mxu0 %v1970
    %2049 = vmatprep.subr.mxu0 %v1973
    %2050 = vmatpush1.msra.mxu0 %v1972
    %2051 = vmatprep.subr.mxu0 %v1975
    %2052 = vmatpush1.msra.mxu0 %v1974
    %2053 = vmatprep.subr.mxu0 %v1977
    %2054 = vmatpush1.msra.mxu0 %v1976
    %2055 = vmatprep.subr.mxu0 %v1979
    %2056 = vmatpush1.msra.mxu0 %v1978
    %2057 = vmatprep.subr.mxu0 %v1981
    %2058 = vmatpush1.msra.mxu0 %v1980
    %2059 = vmatprep.subr.mxu0 %v1983
    %2060 = vmatpush1.msra.mxu0 %v1982
    %2061 = vmatprep.subr.mxu0 %v1985
    %2062 = vmatpush1.msra.mxu0 %v1984
    %2063 = vmatprep.subr.mxu0 %v1987
    %2064 = vmatpush1.msra.mxu0 %v1986
    %2065 = vmatprep.mubr.f32.mxu0 %v1923
    %2066 = vmatmul.mubr.f32.gmra.mrb[0].mxu0 %v1920
    %v2067 = vpop.f32.mrb[0].mxu0
    %v2068 = vadd.f32 %v1994, %v2067
    %v2069 = vpop.f32.mrb[0].mxu0
    %v2070 = vadd.f32 %v1998, %v2069
    %2071 = vdwg.mxu0
    %2072 = vst [vmem:[%s5] sm:$0xff] %v2068
    %2073 = vst [vmem:[%s5 + $0x8] sm:$0xff] %v2070
    // Predicated region
    $region30: #{decoder_forward.1} parent=1 // pred_check
      _
    $region31: #{decoder_forward.1} parent=1 // pred_check_branch
      %2075 = sbr.rel (0) target = $region33
    $region32: #{decoder_forward.1} parent=1 // pred_region
      _
    $region33: #{decoder_forward.1} parent=1 // pred_fallthru
      _
    // Predicated region
    $region34: #{decoder_forward.1} parent=1 // pred_check
      _
    $region35: #{decoder_forward.1} parent=1 // pred_check_branch
      %2077 = sbr.rel (0) target = $region37
    $region36: #{decoder_forward.1} parent=1 // pred_region
      _
    $region37: #{decoder_forward.1} parent=1 // pred_fallthru
      _
    // Predicated region
    $region38: #{decoder_forward.1} parent=1 // pred_check
      _
    $region39: #{decoder_forward.1} parent=1 // pred_check_branch
      %2079 = sbr.rel (0) target = $region41
    $region40: #{decoder_forward.1} parent=1 // pred_region
      _
    $region41: #{decoder_forward.1} parent=1 // pred_fallthru
      _
    // Predicated region
    $region42: #{decoder_forward.1} parent=1 // pred_check
      _
    $region43: #{decoder_forward.1} parent=1 // pred_check_branch
      %2081 = sbr.rel (0) target = $region45
    $region44: #{decoder_forward.1} parent=1 // pred_region
      _
    $region45: #{decoder_forward.1} parent=1 // pred_fallthru
      _
    %2082 = vsyncpa [#allocation3], 1
    %2083 = vsyncpa [#allocation5], 1

</llo_original>
